<compile_context>
chip_gen: v6e
topology: v6e:2x2x1
jax: 0.10.0
libtpu: 0.0.40
codegen_flags: <defaults>
</compile_context>

<pallas_src>
import math
import functools

import jax
import jax.numpy as jnp
from jax.experimental import pallas as pl
from jax.experimental.pallas import tpu as pltpu


# ----------------------------- Pallas kernel ------------------------------

def _gemma_mlp_kernel(x_ref, wgu_ref, wd_ref, o_ref, acc_ref, *, ti):
    """One (m, i) grid step of the fused MLP.

    x_ref  : (tm, H)     bf16 activation tile (same block for every i step)
    wgu_ref: (H, 2*ti)   bf16 packed [gate | up] weight column block
    wd_ref : (ti, H)     bf16 down_proj weight row block
    o_ref  : (tm, H)     output tile (resident across the i axis)
    acc_ref: (tm, H) f32 VMEM accumulator scratch
    """
    i = pl.program_id(1)  # intermediate-dim block index (reduction axis)

    @pl.when(i == 0)
    def _():
        acc_ref[...] = jnp.zeros_like(acc_ref)

    x = x_ref[...]  # (tm, H) bf16

    # One wide MXU pass for gate and up (shared LHS), fp32 accumulation.
    gu = jnp.dot(x, wgu_ref[...], preferred_element_type=jnp.float32)  # (tm, 2*ti)
    gate = gu[:, :ti]
    up = gu[:, ti:]

    # GELU (tanh approximation, matches torch gelu(..., approximate='tanh')),
    # fp32 on the VPU/EUP as filler under the MXU.
    c = math.sqrt(2.0 / math.pi)
    g = 0.5 * gate * (1.0 + jnp.tanh(c * (gate + 0.044715 * gate * gate * gate)))
    h = (g * up).astype(wd_ref.dtype)  # bf16 operand for the down-proj pass

    # Partial down-projection for this intermediate block; accumulate fp32.
    acc_ref[...] += jnp.dot(h, wd_ref[...], preferred_element_type=jnp.float32)

    @pl.when(i == pl.num_programs(1) - 1)
    def _():
        o_ref[...] = acc_ref[...].astype(o_ref.dtype)


# ------------------------------ tiling logic --------------------------------

def _round_up(x, m):
    return ((x + m - 1) // m) * m


def _vmem_limit_bytes():
    """VMEM budget derived from the actual part (fallback = v7x's 64 MiB)."""
    try:
        cap = int(pltpu.get_tpu_info().vmem_capacity_bytes)
    except Exception:
        cap = 64 * 1024 * 1024
    return min(cap - 8 * 1024 * 1024, int(cap * 0.85))


def _pick_ti(I):
    """Intermediate-axis tile: prefer 256-aligned (v6e/v7x 2x256^2 MXU)."""
    for t in (512, 256, 128):
        if I % t == 0:
            return t
    if I >= 128:
        return 128  # pad I up to a multiple of 128 at prep time
    return I        # tiny intermediate: single full block


def _select_tm(M, H, ti, out_itemsize, x_itemsize, w_itemsize, vmem_limit):
    """Largest M tile whose double-buffered resident set fits the VMEM budget,
    padded rather than falling back to tiny divisors; keeps >=2 m-blocks when
    M permits (megacore sharding of the 'parallel' axis)."""
    budget = int(vmem_limit * 0.9)  # compiler / internal-scratch headroom

    def resident(tm):
        return (2 * tm * H * x_itemsize          # x tile (double-buffered)
                + 2 * H * (2 * ti) * w_itemsize  # packed gate/up weight block
                + 2 * ti * H * w_itemsize        # down-proj weight block
                + 2 * tm * H * out_itemsize      # output tile
                + tm * H * 4)                    # fp32 accumulator scratch

    tm = 128
    for cand in (1024, 768, 512, 384, 256, 128):
        if resident(cand) <= budget:
            tm = cand
            break

    m_pad8 = _round_up(max(M, 1), 8)
    if m_pad8 <= tm:
        # Small-M (decode) path: tile = data; split in two when possible so the
        # parallel m axis can still use both v7x TensorCores.
        if m_pad8 >= 16:
            tm = _round_up(-(-m_pad8 // 2), 8)
        else:
            tm = m_pad8
    M_pad = _round_up(m_pad8, tm)
    return tm, M_pad


# ------------------------- one-time weight preparation -----------------------

def prepare_gemma_mlp_weights(wg, wu, wd, *, ti=None, compute_dtype=jnp.bfloat16):
    """Cast + pack weights ONCE at parameter-load time (not per forward call).

    wg, wu: (H, I)   gate / up projection weights (y = x @ W layout)
    wd    : (I, H)   down projection weight
    Returns (wgu_packed (H, 2*I_pad), wd (I_pad, H), ti).
    Packing: per ti-block interleave [gate_blk0 | up_blk0 | gate_blk1 | ...].
    """
    H, I = wg.shape
    if ti is None:
        ti = _pick_ti(I)
    I_pad = _round_up(I, ti)
    if I_pad != I:
        pad = I_pad - I
        wg = jnp.pad(wg, ((0, 0), (0, pad)))
        wu = jnp.pad(wu, ((0, 0), (0, pad)))
        wd = jnp.pad(wd, ((0, pad), (0, 0)))

    wg = wg.astype(compute_dtype)
    wu = wu.astype(compute_dtype)
    wd = wd.astype(compute_dtype)

    nb = I_pad // ti
    wg_blocks = wg.reshape(H, nb, ti)
    wu_blocks = wu.reshape(H, nb, ti)
    wgu = jnp.concatenate([wg_blocks, wu_blocks], axis=2).reshape(H, 2 * I_pad)
    return wgu, wd, ti


# ------------------------------- forward wrapper -----------------------------

def gemma_mlp(x, wgu, wd, *, ti, tm=None, out_dtype=None):
    """Fused GemmaMLP forward with pre-packed weights.

    x  : (..., H)         activations (any leading dims)
    wgu: (H, 2*I_pad)     packed gate/up weights from prepare_gemma_mlp_weights
    wd : (I_pad, H)       down_proj weight (possibly zero-padded rows)
    returns (..., H) in out_dtype (default x.dtype)
    """
    orig_shape = x.shape
    H = orig_shape[-1]
    I_pad = wd.shape[0]
    assert wgu.shape == (H, 2 * I_pad)
    assert I_pad % ti == 0

    out_dtype = out_dtype if out_dtype is not None else x.dtype
    compute_dtype = wgu.dtype

    x2d = x.reshape(-1, H).astype(compute_dtype)  # activation cast only (cheap)
    M = x2d.shape[0]

    out_itemsize = jnp.dtype(out_dtype).itemsize
    x_itemsize = jnp.dtype(compute_dtype).itemsize
    w_itemsize = jnp.dtype(wgu.dtype).itemsize
    vmem_limit = _vmem_limit_bytes()

    if tm is None:
        tm, M_pad = _select_tm(M, H, ti, out_itemsize, x_itemsize, w_itemsize,
                               vmem_limit)
    else:
        M_pad = _round_up(M, tm)

    if M_pad != M:
        x2d = jnp.pad(x2d, ((0, M_pad - M), (0, 0)))

    grid = (M_pad // tm, I_pad // ti)
    num_m = grid[0]

    cost = pl.CostEstimate(
        flops=6 * M_pad * H * I_pad,
        transcendentals=M_pad * I_pad,
        bytes_accessed=(M_pad * H * x_itemsize
                        + num_m * 3 * H * I_pad * w_itemsize  # weights per m block
                        + M_pad * H * out_itemsize),
    )

    out2d = pl.pallas_call(
        functools.partial(_gemma_mlp_kernel, ti=ti),
        out_shape=jax.ShapeDtypeStruct((M_pad, H), out_dtype),
        grid_spec=pltpu.PrefetchScalarGridSpec(
            num_scalar_prefetch=0,
            grid=grid,
            in_specs=[
                pl.BlockSpec((tm, H), lambda m, i: (m, 0)),       # x tile
                pl.BlockSpec((H, 2 * ti), lambda m, i: (0, i)),   # packed gate/up
                pl.BlockSpec((ti, H), lambda m, i: (i, 0)),       # down_proj rows
            ],
            # Same output block across the i axis -> accumulator-resident output.
            out_specs=pl.BlockSpec((tm, H), lambda m, i: (m, 0)),
            scratch_shapes=[pltpu.VMEM((tm, H), jnp.float32)],
        ),
        compiler_params=pltpu.CompilerParams(
            # M axis parallel (megacore), reduction axis last + arbitrary.
            dimension_semantics=("parallel", "arbitrary"),
            vmem_limit_bytes=int(vmem_limit),
        ),
        cost_estimate=cost,
    )(x2d, wgu, wd)

    if M_pad != M:
        out2d = out2d[:M]
    return out2d.reshape(orig_shape[:-1] + (H,))


# --------------------------- pure-JAX reference -----------------------------

def gemma_mlp_reference(x, wg, wu, wd, compute_dtype=jnp.bfloat16):
    """Same math (bf16 operands, fp32 accumulation) in plain JAX."""
    orig_shape = x.shape
    x2d = x.reshape(-1, orig_shape[-1]).astype(compute_dtype)
    wgb = wg.astype(compute_dtype)
    wub = wu.astype(compute_dtype)
    wdb = wd.astype(compute_dtype)
    gate = jnp.dot(x2d, wgb, preferred_element_type=jnp.float32)
    up = jnp.dot(x2d, wub, preferred_element_type=jnp.float32)
    c = math.sqrt(2.0 / math.pi)
    g = 0.5 * gate * (1.0 + jnp.tanh(c * (gate + 0.044715 * gate * gate * gate)))
    h = (g * up).astype(compute_dtype)
    out = jnp.dot(h, wdb, preferred_element_type=jnp.float32)
    return out.astype(x.dtype).reshape(orig_shape)


# --------------------------------- main ------------------------------------

if __name__ == "__main__":
    # Small shapes consistent with GemmaMLP: x is (batch, seq, hidden).
    B, S = 2, 8
    HIDDEN = 256
    INTERMEDIATE = 512

    key = jax.random.PRNGKey(0)
    kx, kg, ku, kd = jax.random.split(key, 4)

    x = jax.random.normal(kx, (B, S, HIDDEN), dtype=jnp.float32)
    # Weights stored as (in_features, out_features): y = x @ W (equivalent to
    # torch nn.Linear(in, out, bias=False) with W_torch = W.T).
    wg = 0.05 * jax.random.normal(kg, (HIDDEN, INTERMEDIATE), dtype=jnp.float32)
    wu = 0.05 * jax.random.normal(ku, (HIDDEN, INTERMEDIATE), dtype=jnp.float32)
    wd = 0.05 * jax.random.normal(kd, (INTERMEDIATE, HIDDEN), dtype=jnp.float32)

    # One-time weight prep (cast + pack) OUTSIDE the per-call path.
    wgu_p, wd_p, ti = prepare_gemma_mlp_weights(wg, wu, wd)
    wgu_p = jax.block_until_ready(wgu_p)
    wd_p = jax.block_until_ready(wd_p)

    fwd = jax.jit(functools.partial(gemma_mlp, ti=ti))
    out = jax.block_until_ready(fwd(x, wgu_p, wd_p))

    assert out.shape == (B, S, HIDDEN)
    assert out.dtype == jnp.float32

    ref = jax.block_until_ready(gemma_mlp_reference(x, wg, wu, wd))
    assert bool(jnp.allclose(out, ref, rtol=1e-2, atol=1e-3)), "mismatch vs reference"

    print("KERNEL_OK")
</pallas_src>

<mosaic_0001>
module attributes {stable_mosaic.version = 11 : i64} {
  func.func @_gemma_mlp_kernel(%arg0: i32, %arg1: i32, %arg2: memref<8x256xbf16, #tpu.memory_space<vmem>>, %arg3: memref<256x1024xbf16, #tpu.memory_space<vmem>>, %arg4: memref<512x256xbf16, #tpu.memory_space<vmem>>, %arg5: memref<8x256xf32, #tpu.memory_space<vmem>>, %arg6: memref<8x256xf32, #tpu.memory_space<vmem>>) attributes {dimension_semantics = [#tpu.dimension_semantics<parallel>, #tpu.dimension_semantics<arbitrary>], iteration_bounds = array<i64: 2, 1>, scalar_prefetch = 0 : i64, scratch_operands = 1 : i64, tpu.core_type = #tpu.core_type<tc>, window_params = [{transform_indices = @transform_0, window_bounds = array<i64: 8, 256>}, {transform_indices = @transform_1, window_bounds = array<i64: 256, 1024>}, {transform_indices = @transform_2, window_bounds = array<i64: 512, 256>}, {transform_indices = @transform_3, window_bounds = array<i64: 8, 256>}]} {
    %c0_i32 = arith.constant 0 : i32
    %0 = arith.cmpi eq, %arg1, %c0_i32 : i32
    %1 = arith.extui %0 : i1 to i32
    %c0_i32_0 = arith.constant 0 : i32
    %2 = arith.cmpi ne, %1, %c0_i32_0 : i32
    scf.if %2 {
      %cst_17 = arith.constant 0.000000e+00 : f32
      %31 = vector.broadcast %cst_17 : f32 to vector<8x256xf32>
      %c0_18 = arith.constant 0 : index
      %c0_19 = arith.constant 0 : index
      %32 = vector.load %arg6[%c0_18, %c0_19] : memref<8x256xf32, #tpu.memory_space<vmem>>, vector<8x256xf32>
      tpu.vector_store %arg6[%c0_18, %c0_19], %31 {strides = array<i32>} : memref<8x256xf32, #tpu.memory_space<vmem>>, vector<8x256xf32>,
    } else {
    }
    %c0 = arith.constant 0 : index
    %c0_1 = arith.constant 0 : index
    %3 = vector.load %arg2[%c0, %c0_1] : memref<8x256xbf16, #tpu.memory_space<vmem>>, vector<8x256xbf16>
    %c0_2 = arith.constant 0 : index
    %c0_3 = arith.constant 0 : index
    %4 = vector.load %arg3[%c0_2, %c0_3] : memref<256x1024xbf16, #tpu.memory_space<vmem>>, vector<256x1024xbf16>
    %cst = arith.constant dense<0.000000e+00> : vector<8x1024xf32>
    %5 = tpu.matmul %3, %4, %cst {dimension_numbers = #tpu.dot_dimension_numbers<[1], [0], [0], [1], [0, 0, 1, 1], [], []>} : vector<8x256xbf16>, vector<256x1024xbf16>, vector<8x1024xf32> -> vector<8x1024xf32>
    %6 = vector.extract_strided_slice %5 {offsets = [0, 0], sizes = [8, 512], strides = [1, 1]} : vector<8x1024xf32> to vector<8x512xf32>
    %7 = vector.extract_strided_slice %5 {offsets = [0, 512], sizes = [8, 512], strides = [1, 1]} : vector<8x1024xf32> to vector<8x512xf32>
    %cst_4 = arith.constant 5.000000e-01 : f32
    %8 = vector.broadcast %cst_4 : f32 to vector<8x512xf32>
    %9 = arith.mulf %8, %6 : vector<8x512xf32>
    %cst_5 = arith.constant 4.471500e-02 : f32
    %10 = vector.broadcast %cst_5 : f32 to vector<8x512xf32>
    %11 = arith.mulf %10, %6 : vector<8x512xf32>
    %12 = arith.mulf %11, %6 : vector<8x512xf32>
    %13 = arith.mulf %12, %6 : vector<8x512xf32>
    %14 = arith.addf %6, %13 : vector<8x512xf32>
    %cst_6 = arith.constant 0.797884583 : f32
    %15 = vector.broadcast %cst_6 : f32 to vector<8x512xf32>
    %16 = arith.mulf %15, %14 : vector<8x512xf32>
    %17 = math.tanh %16 : vector<8x512xf32>
    %cst_7 = arith.constant 1.000000e+00 : f32
    %18 = vector.broadcast %cst_7 : f32 to vector<8x512xf32>
    %19 = arith.addf %18, %17 : vector<8x512xf32>
    %20 = arith.mulf %9, %19 : vector<8x512xf32>
    %21 = arith.mulf %20, %7 : vector<8x512xf32>
    %22 = arith.truncf %21 : vector<8x512xf32> to vector<8x512xbf16>
    %c0_8 = arith.constant 0 : index
    %c0_9 = arith.constant 0 : index
    %23 = vector.load %arg6[%c0_8, %c0_9] : memref<8x256xf32, #tpu.memory_space<vmem>>, vector<8x256xf32>
    %c0_10 = arith.constant 0 : index
    %c0_11 = arith.constant 0 : index
    %24 = vector.load %arg4[%c0_10, %c0_11] : memref<512x256xbf16, #tpu.memory_space<vmem>>, vector<512x256xbf16>
    %cst_12 = arith.constant dense<0.000000e+00> : vector<8x256xf32>
    %25 = tpu.matmul %22, %24, %cst_12 {dimension_numbers = #tpu.dot_dimension_numbers<[1], [0], [0], [1], [0, 0, 1, 1], [], []>} : vector<8x512xbf16>, vector<512x256xbf16>, vector<8x256xf32> -> vector<8x256xf32>
    %26 = arith.addf %23, %25 : vector<8x256xf32>
    %c0_13 = arith.constant 0 : index
    %c0_14 = arith.constant 0 : index
    %27 = vector.load %arg6[%c0_13, %c0_14] : memref<8x256xf32, #tpu.memory_space<vmem>>, vector<8x256xf32>
    tpu.vector_store %arg6[%c0_13, %c0_14], %26 {strides = array<i32>} : memref<8x256xf32, #tpu.memory_space<vmem>>, vector<8x256xf32>,
    %c0_i32_15 = arith.constant 0 : i32
    %28 = arith.cmpi eq, %arg1, %c0_i32_15 : i32
    %29 = arith.extui %28 : i1 to i32
    %c0_i32_16 = arith.constant 0 : i32
    %30 = arith.cmpi ne, %29, %c0_i32_16 : i32
    scf.if %30 {
      %c0_17 = arith.constant 0 : index
      %c0_18 = arith.constant 0 : index
      %31 = vector.load %arg6[%c0_17, %c0_18] : memref<8x256xf32, #tpu.memory_space<vmem>>, vector<8x256xf32>
      %c0_19 = arith.constant 0 : index
      %c0_20 = arith.constant 0 : index
      %32 = vector.load %arg5[%c0_19, %c0_20] : memref<8x256xf32, #tpu.memory_space<vmem>>, vector<8x256xf32>
      tpu.vector_store %arg5[%c0_19, %c0_20], %31 {strides = array<i32>} : memref<8x256xf32, #tpu.memory_space<vmem>>, vector<8x256xf32>,
    } else {
    }
    return
  }
  func.func @transform_0(%arg0: i32, %arg1: i32) -> (i32, i32) {
    %c0_i32 = arith.constant 0 : i32
    %c0_i32_0 = arith.constant 0 : i32
    return %arg0, %c0_i32 : i32, i32
  }
  func.func @transform_1(%arg0: i32, %arg1: i32) -> (i32, i32) {
    %c0_i32 = arith.constant 0 : i32
    %c0_i32_0 = arith.constant 0 : i32
    return %c0_i32, %arg1 : i32, i32
  }
  func.func @transform_2(%arg0: i32, %arg1: i32) -> (i32, i32) {
    %c0_i32 = arith.constant 0 : i32
    %c0_i32_0 = arith.constant 0 : i32
    return %arg1, %c0_i32 : i32, i32
  }
  func.func @transform_3(%arg0: i32, %arg1: i32) -> (i32, i32) {
    %c0_i32 = arith.constant 0 : i32
    %c0_i32_0 = arith.constant 0 : i32
    return %arg0, %c0_i32 : i32, i32
  }
}

</mosaic_0001>

<llo_original>
// kernel: gemma_mlp.1
$region0: #{gemma_mlp.1}
  #allocation0 [shape = 'u32[]', space=smem, size = 0x4, offset = 0x4, fixed_abs, tag = 'smem constant byte address 0x4 - core index']
  #allocation1 [shape = 'u32[144,128]{1,0:T(1,128)}', space=vmem, size = 0x12000, scoped, tag = 'internal scratch']
  #allocation2 [shape = 'f32[8,256]{1,0:T(8,128)}', space=vmem, size = 0x2000, scoped, tag = 'scratch operand']
  %s0 = inlined_call_operand.vmem [shape: bf16[16,256], index: 0, kind: input, shape index: {}]
  %s1 = inlined_call_operand.hbm [shape: bf16[256,1024], index: 1, kind: input, shape index: {}]
  %s2 = inlined_call_operand.hbm [shape: bf16[512,256], index: 2, kind: input, shape index: {}]
  %s3 = inlined_call_operand.hbm [shape: f32[16,256], index: 3, kind: output, shape index: {}]
  %s4 = sld [smem:[#allocation0]]
  $region61: #{gemma_mlp.1} parent=0
    _
  %s6 = ssub.s32 1, %s4
  %s7 = scalar_select 0, %s6, %s4
  $region1: #{gemma_mlp.1} parent=0
    #allocation3 [shape = 'u8[524288]{0}', space=vmem, size = 0x80000, scoped, tag = 'input window, operand 1, single buffered']
    #allocation4 [shape = 's32[2]{0}', space=sflag, size = 0x8, scoped, tag = 'scoped memory for gemma_mlp.1']
    #allocation5 [shape = 's32[2]{0}', space=sflag, size = 0x8, scoped, tag = 'scoped memory for gemma_mlp.1']
    #allocation6 [shape = 'u8[262144]{0}', space=vmem, size = 0x40000, scoped, tag = 'input window, operand 2, single buffered']
    #allocation7 [shape = 's32[1]{0}', space=sflag, size = 0x4, scoped, tag = 'scoped memory for gemma_mlp.1']
    #allocation8 [shape = 'u8[16384]{0}', space=vmem, size = 0x4000, scoped, tag = 'output window, operand 0']
    %8 = vsyncpa [#allocation4], 0
    %9 = vsyncpa [#allocation7], 0
    %10 = vsyncpa [#allocation5], 0
    %s11 = scalar_lea.sflag [#allocation5], 1
    %12 = vsyncpa %s11, 0
    loop: start=0, step=1, limit=4
    $region2: #{gemma_mlp.1} parent=1 // loop_pre_header
      _
    $region3: #{gemma_mlp.1} parent=1 // loop_header
      %s14 = sphi 0, %s18
      %p15 = scmp.ge.s32.totalorder %s14, 4
      %s21 = sphi 0, %s33
      %s22 = sphi 0, %s29
      %s23 = sphi 0, %s21
      %s24 = sphi 0, %s22
      %s25 = sphi 0, %s23
      %s26 = sphi 0, %s24
      %s36 = sphi 0, %s38
      %s39 = sphi 0, %s36
      %s40 = sphi 0, %s39
      %s56 = sphi 0, %s40
      %s62 = sphi 0, %s64
      %s65 = sphi 0, %s62
      %s66 = sphi 0, %s65
      %s82 = sphi 0, %s66
      %s88 = sphi 0, %s90
      %s91 = sphi 0, %s88
      %s92 = sphi 0, %s91
      %s108 = sphi 0, %s92
      %s114 = sphi 0, %s116
      %s117 = sphi 0, %s114
      %s118 = sphi 0, %s117
      %s134 = sphi 0, %s118
    $region4: #{gemma_mlp.1} parent=1 // loop_header_branch
      %17 = sbr.rel (%p15) target = $region8
    $region5: #{gemma_mlp.1} parent=1 // loop_body
      %s19 = ssub.s32 %s14, 1
      %s20 = ssub.s32 %s14, 2
      %s27 = sadd.s32 1, %s22
      %p28 = scmp.ge.s32.totalorder %s27, 1
      %s29 = scalar_select %p28, 0, %s27
      %s30 = sadd.s32 1, %s21
      %s31 = scalar_select %p28, %s30, %s21
      %p32 = scmp.ge.s32.totalorder %s31, 2
      %s33 = scalar_select %p32, 0, %s31
      %s34 = ssub.s32 %s21, %s33
      %p35 = scmp.eq.s32.totalorder %s34, 0
      %s37 = sadd.s32 %s36, 1
      %s38 = scalar_select %p35, %s36, %s37
      %p41 = pneg %p35
      %p42 = scmp.eq.s32.totalorder %s14, 1
      %p43 = por %p41, %p42
      %p44 = scmp.ne.s32.totalorder %s36, %s39
      %p45 = scmp.eq.s32.totalorder %s14, 0
      %p46 = por %p44, %p45
      %p47 = scmp.ne.s32.totalorder %s36, %s39
      %p48 = scmp.eq.s32.totalorder %s19, 1
      %p49 = por %p47, %p48
      %p50 = scmp.ne.s32.totalorder %s39, %s40
      %p51 = scmp.eq.s32.totalorder %s19, 0
      %p52 = por %p50, %p51
      %p53 = scmp.ne.s32.totalorder %s39, %s40
      %p54 = scmp.eq.s32.totalorder %s20, 1
      %p55 = por %p53, %p54
      %p57 = scmp.ne.s32.totalorder %s40, %s56
      %p58 = scmp.eq.s32.totalorder %s20, 0
      %p59 = por %p57, %p58
      %s60 = ssub.s32 %s22, %s29
      %p61 = scmp.eq.s32.totalorder %s60, 0
      %s63 = sadd.s32 %s62, 1
      %s64 = scalar_select %p61, %s62, %s63
      %p67 = pneg %p61
      %p68 = scmp.eq.s32.totalorder %s14, 1
      %p69 = por %p67, %p68
      %p70 = scmp.ne.s32.totalorder %s62, %s65
      %p71 = scmp.eq.s32.totalorder %s14, 0
      %p72 = por %p70, %p71
      %p73 = scmp.ne.s32.totalorder %s62, %s65
      %p74 = scmp.eq.s32.totalorder %s19, 1
      %p75 = por %p73, %p74
      %p76 = scmp.ne.s32.totalorder %s65, %s66
      %p77 = scmp.eq.s32.totalorder %s19, 0
      %p78 = por %p76, %p77
      %p79 = scmp.ne.s32.totalorder %s65, %s66
      %p80 = scmp.eq.s32.totalorder %s20, 1
      %p81 = por %p79, %p80
      %p83 = scmp.ne.s32.totalorder %s66, %s82
      %p84 = scmp.eq.s32.totalorder %s20, 0
      %p85 = por %p83, %p84
      %s86 = ssub.s32 %s22, %s29
      %p87 = scmp.eq.s32.totalorder %s86, 0
      %s89 = sadd.s32 %s88, 1
      %s90 = scalar_select %p87, %s88, %s89
      %p93 = pneg %p87
      %p94 = scmp.eq.s32.totalorder %s14, 1
      %p95 = por %p93, %p94
      %p96 = scmp.ne.s32.totalorder %s88, %s91
      %p97 = scmp.eq.s32.totalorder %s14, 0
      %p98 = por %p96, %p97
      %p99 = scmp.ne.s32.totalorder %s88, %s91
      %p100 = scmp.eq.s32.totalorder %s19, 1
      %p101 = por %p99, %p100
      %p102 = scmp.ne.s32.totalorder %s91, %s92
      %p103 = scmp.eq.s32.totalorder %s19, 0
      %p104 = por %p102, %p103
      %p105 = scmp.ne.s32.totalorder %s91, %s92
      %p106 = scmp.eq.s32.totalorder %s20, 1
      %p107 = por %p105, %p106
      %p109 = scmp.ne.s32.totalorder %s92, %s108
      %p110 = scmp.eq.s32.totalorder %s20, 0
      %p111 = por %p109, %p110
      %s112 = ssub.s32 %s21, %s33
      %p113 = scmp.eq.s32.totalorder %s112, 0
      %s115 = sadd.s32 %s114, 1
      %s116 = scalar_select %p113, %s114, %s115
      %p119 = pneg %p113
      %p120 = scmp.eq.s32.totalorder %s14, 1
      %p121 = por %p119, %p120
      %p122 = scmp.ne.s32.totalorder %s114, %s117
      %p123 = scmp.eq.s32.totalorder %s14, 0
      %p124 = por %p122, %p123
      %p125 = scmp.ne.s32.totalorder %s114, %s117
      %p126 = scmp.eq.s32.totalorder %s19, 1
      %p127 = por %p125, %p126
      %p128 = scmp.ne.s32.totalorder %s117, %s118
      %p129 = scmp.eq.s32.totalorder %s19, 0
      %p130 = por %p128, %p129
      %p131 = scmp.ne.s32.totalorder %s117, %s118
      %p132 = scmp.eq.s32.totalorder %s20, 1
      %p133 = por %p131, %p132
      %p135 = scmp.ne.s32.totalorder %s118, %s134
      %p136 = scmp.eq.s32.totalorder %s20, 0
      %p137 = por %p135, %p136
      %p138 = scmp.le.s32.totalorder 1, %s14
      %p139 = scmp.lt.s32.totalorder %s14, 3
      %p140 = pnand %p138, %p139
      %p141 = pneg %p140
      // Predicated region
      $region9: #{gemma_mlp.1} parent=5 // pred_check
        _
      $region10: #{gemma_mlp.1} parent=5 // pred_check_branch
        %143 = sbr.rel (%p140) target = $region12
      $region11: #{gemma_mlp.1} parent=5 // pred_region
        %s144 = ssub.s32 %s14, 1
        // Predicated region
        $region13: #{gemma_mlp.1} parent=11 // pred_check
          %p145 = pneg %p78
        $region14: #{gemma_mlp.1} parent=11 // pred_check_branch
          %147 = sbr.rel (%p145) target = $region16
        $region15: #{gemma_mlp.1} parent=11 // pred_region
          %s148 = smul.u32 8, %s24
          %s150 = ssub.s32 16384, 16384
          %151 = vsyncadd [#allocation4], %s150
          %s152 = smul.addr %s148, 64
          %s153 = scalar_lea.hbm %s1, %s152
          %s154 = sshll.u32 [#allocation3], 4
          %s155 = int_to_ptr.vmem [resolvable:$true] %s154
          %160 = dma.hbm_to_vmem [thread:$0]  %s153, 16384, %s155, [#allocation4], 512, 512, 32
        $region16: #{gemma_mlp.1} parent=11 // pred_fallthru
          _
        // Predicated region
        $region17: #{gemma_mlp.1} parent=11 // pred_check
          %p161 = pneg %p104
        $region18: #{gemma_mlp.1} parent=11 // pred_check_branch
          %163 = sbr.rel (%p161) target = $region20
        $region19: #{gemma_mlp.1} parent=11 // pred_region
          %s164 = smul.u32 64, %s24
          %s166 = ssub.s32 8192, 8192
          %167 = vsyncadd [#allocation7], %s166
          %s168 = smul.addr %s164, 2
          %s169 = smul.addr %s168, 64
          %s170 = scalar_lea.hbm %s2, %s169
          %s171 = sshll.u32 [#allocation6], 4
          %s172 = int_to_ptr.vmem [resolvable:$true] %s171
          %177 = dma.hbm_to_vmem [thread:$0]  %s170, 8192, %s172, [#allocation7], 128, 128, 8
        $region20: #{gemma_mlp.1} parent=11 // pred_fallthru
          _
      $region12: #{gemma_mlp.1} parent=5 // pred_fallthru
        _
      %p178 = scmp.lt.s32.totalorder %s14, 2
      // Predicated region
      $region21: #{gemma_mlp.1} parent=5 // pred_check
        %p179 = pneg %p178
      $region22: #{gemma_mlp.1} parent=5 // pred_check_branch
        %181 = sbr.rel (%p179) target = $region24
      $region23: #{gemma_mlp.1} parent=5 // pred_region
        // Predicated region
        $region25: #{gemma_mlp.1} parent=23 // pred_check
          %p182 = pneg %p46
        $region26: #{gemma_mlp.1} parent=23 // pred_check_branch
          %184 = sbr.rel (%p182) target = $region28
        $region27: #{gemma_mlp.1} parent=23 // pred_region
          %p185 = scmp.lt.s32.totalorder %s21, 1
          %s186 = scalar_select %p185, %s21, 1
          %s187 = smul.addr %s186, 2
          %s188 = smul.addr %s187, 4
          %s189 = scalar_lea.vmem %s0, %s188
        $region28: #{gemma_mlp.1} parent=23 // pred_fallthru
          _
      $region24: #{gemma_mlp.1} parent=5 // pred_fallthru
        _
      %p190 = scmp.le.s32.totalorder 1, %s14
      %p191 = scmp.lt.s32.totalorder %s14, 3
      %p192 = pnand %p190, %p191
      %p193 = pneg %p192
      // Predicated region
      $region29: #{gemma_mlp.1} parent=5 // pred_check
        _
      $region30: #{gemma_mlp.1} parent=5 // pred_check_branch
        %195 = sbr.rel (%p192) target = $region32
      $region31: #{gemma_mlp.1} parent=5 // pred_region
        %s196 = ssub.s32 %s14, 1
        // Predicated region
        $region33: #{gemma_mlp.1} parent=31 // pred_check
          %p197 = pneg %p78
        $region34: #{gemma_mlp.1} parent=31 // pred_check_branch
          %199 = sbr.rel (%p197) target = $region36
        $region35: #{gemma_mlp.1} parent=31 // pred_region
          %200 = dma.done [#allocation4], 16384
        $region36: #{gemma_mlp.1} parent=31 // pred_fallthru
          _
        // Predicated region
        $region37: #{gemma_mlp.1} parent=31 // pred_check
          %p201 = pneg %p104
        $region38: #{gemma_mlp.1} parent=31 // pred_check_branch
          %203 = sbr.rel (%p201) target = $region40
        $region39: #{gemma_mlp.1} parent=31 // pred_region
          %204 = dma.done [#allocation7], 8192
        $region40: #{gemma_mlp.1} parent=31 // pred_fallthru
          _
        %p205 = scmp.lt.s32.totalorder %s23, 1
        %s206 = scalar_select %p205, %s23, 1
        %s207 = smul.addr %s206, 2
        %s208 = smul.addr %s207, 4
        %s209 = scalar_lea.vmem %s0, %s208
        %p210 = pneg %p52
        %p211 = pneg %p49
        %p212 = pneg %p78
        %p213 = pneg %p75
        %p214 = pneg %p104
        %p215 = pneg %p101
        %p216 = pneg %p130
        %p217 = pneg %p127
        %s218 = sand.u32 %s117, 1
        %s219 = scalar_lea.sflag [#allocation5], %s218
        %s220 = sand.u32 %s117, 1
        %s221 = smul.addr %s220, 16
        %s222 = scalar_lea.vmem [#allocation8], %s221
        %p223 = scmp.lt.s32.totalorder %s23, 1
        %s224 = scalar_select %p223, %s23, 1
        %s225 = smul.addr %s224, 2
        %s226 = smul.addr %s225, 4
        %s227 = scalar_lea.vmem %s0, %s226
        %s228 = smul.u32 8, %s24
        %s229 = smul.u32 64, %s24
        %p230 = scmp.eq.s32.totalorder %s24, 0
        // Predicated region
        $region41: #{gemma_mlp.1} parent=31 // pred_check
          %p231 = pneg %p230
        $region42: #{gemma_mlp.1} parent=31 // pred_check_branch
          %233 = sbr.rel (%p231) target = $region44
        $region43: #{gemma_mlp.1} parent=31 // pred_region
          %234 = vst [vmem:[#allocation2] sm:$0xff] 0.0
          %235 = vst [vmem:[#allocation2 + $0x8] sm:$0xff] 0.0
        $region44: #{gemma_mlp.1} parent=31 // pred_fallthru
          _
        %v236 = vld [vmem:[%s227] sm:$0xff]
        %v237 = vld [vmem:[#allocation3] sm:$0xff]
        %v238 = vld [vmem:[#allocation3 + $0x8] sm:$0xff]
        %v239 = vld [vmem:[#allocation3 + $0x10] sm:$0xff]
        %v240 = vld [vmem:[#allocation3 + $0x18] sm:$0xff]
        %v241 = vld [vmem:[#allocation3 + $0x20] sm:$0xff]
        %v242 = vld [vmem:[#allocation3 + $0x28] sm:$0xff]
        %v243 = vld [vmem:[#allocation3 + $0x30] sm:$0xff]
        %v244 = vld [vmem:[#allocation3 + $0x38] sm:$0xff]
        %v245 = vld [vmem:[#allocation3 + $0x40] sm:$0xff]
        %v246 = vld [vmem:[#allocation3 + $0x48] sm:$0xff]
        %v247 = vld [vmem:[#allocation3 + $0x50] sm:$0xff]
        %v248 = vld [vmem:[#allocation3 + $0x58] sm:$0xff]
        %v249 = vld [vmem:[#allocation3 + $0x60] sm:$0xff]
        %v250 = vld [vmem:[#allocation3 + $0x68] sm:$0xff]
        %v251 = vld [vmem:[#allocation3 + $0x70] sm:$0xff]
        %v252 = vld [vmem:[#allocation3 + $0x78] sm:$0xff]
        %v253 = vld [vmem:[#allocation3 + $0x80] sm:$0xff]
        %v254 = vld [vmem:[#allocation3 + $0x88] sm:$0xff]
        %v255 = vld [vmem:[#allocation3 + $0x90] sm:$0xff]
        %v256 = vld [vmem:[#allocation3 + $0x98] sm:$0xff]
        %v257 = vld [vmem:[#allocation3 + $0xa0] sm:$0xff]
        %v258 = vld [vmem:[#allocation3 + $0xa8] sm:$0xff]
        %v259 = vld [vmem:[#allocation3 + $0xb0] sm:$0xff]
        %v260 = vld [vmem:[#allocation3 + $0xb8] sm:$0xff]
        %v261 = vld [vmem:[#allocation3 + $0xc0] sm:$0xff]
        %v262 = vld [vmem:[#allocation3 + $0xc8] sm:$0xff]
        %v263 = vld [vmem:[#allocation3 + $0xd0] sm:$0xff]
        %v264 = vld [vmem:[#allocation3 + $0xd8] sm:$0xff]
        %v265 = vld [vmem:[#allocation3 + $0xe0] sm:$0xff]
        %v266 = vld [vmem:[#allocation3 + $0xe8] sm:$0xff]
        %v267 = vld [vmem:[#allocation3 + $0xf0] sm:$0xff]
        %v268 = vld [vmem:[#allocation3 + $0xf8] sm:$0xff]
        %v269 = vld [vmem:[#allocation3 + $0x100] sm:$0xff]
        %v270 = vld [vmem:[#allocation3 + $0x108] sm:$0xff]
        %v271 = vld [vmem:[#allocation3 + $0x110] sm:$0xff]
        %v272 = vld [vmem:[#allocation3 + $0x118] sm:$0xff]
        %v273 = vld [vmem:[#allocation3 + $0x120] sm:$0xff]
        %v274 = vld [vmem:[#allocation3 + $0x128] sm:$0xff]
        %v275 = vld [vmem:[#allocation3 + $0x130] sm:$0xff]
        %v276 = vld [vmem:[#allocation3 + $0x138] sm:$0xff]
        %v277 = vld [vmem:[#allocation3 + $0x140] sm:$0xff]
        %v278 = vld [vmem:[#allocation3 + $0x148] sm:$0xff]
        %v279 = vld [vmem:[#allocation3 + $0x150] sm:$0xff]
        %v280 = vld [vmem:[#allocation3 + $0x158] sm:$0xff]
        %v281 = vld [vmem:[#allocation3 + $0x160] sm:$0xff]
        %v282 = vld [vmem:[#allocation3 + $0x168] sm:$0xff]
        %v283 = vld [vmem:[#allocation3 + $0x170] sm:$0xff]
        %v284 = vld [vmem:[#allocation3 + $0x178] sm:$0xff]
        %v285 = vld [vmem:[#allocation3 + $0x180] sm:$0xff]
        %v286 = vld [vmem:[#allocation3 + $0x188] sm:$0xff]
        %v287 = vld [vmem:[#allocation3 + $0x190] sm:$0xff]
        %v288 = vld [vmem:[#allocation3 + $0x198] sm:$0xff]
        %v289 = vld [vmem:[#allocation3 + $0x1a0] sm:$0xff]
        %v290 = vld [vmem:[#allocation3 + $0x1a8] sm:$0xff]
        %v291 = vld [vmem:[#allocation3 + $0x1b0] sm:$0xff]
        %v292 = vld [vmem:[#allocation3 + $0x1b8] sm:$0xff]
        %v293 = vld [vmem:[#allocation3 + $0x1c0] sm:$0xff]
        %v294 = vld [vmem:[#allocation3 + $0x1c8] sm:$0xff]
        %v295 = vld [vmem:[#allocation3 + $0x1d0] sm:$0xff]
        %v296 = vld [vmem:[#allocation3 + $0x1d8] sm:$0xff]
        %v297 = vld [vmem:[#allocation3 + $0x1e0] sm:$0xff]
        %v298 = vld [vmem:[#allocation3 + $0x1e8] sm:$0xff]
        %v299 = vld [vmem:[#allocation3 + $0x1f0] sm:$0xff]
        %v300 = vld [vmem:[#allocation3 + $0x1f8] sm:$0xff]
        %v301 = vld [vmem:[#allocation3 + $0x200] sm:$0xff]
        %v302 = vld [vmem:[#allocation3 + $0x208] sm:$0xff]
        %v303 = vld [vmem:[#allocation3 + $0x210] sm:$0xff]
        %v304 = vld [vmem:[#allocation3 + $0x218] sm:$0xff]
        %v305 = vld [vmem:[#allocation3 + $0x220] sm:$0xff]
        %v306 = vld [vmem:[#allocation3 + $0x228] sm:$0xff]
        %v307 = vld [vmem:[#allocation3 + $0x230] sm:$0xff]
        %v308 = vld [vmem:[#allocation3 + $0x238] sm:$0xff]
        %v309 = vld [vmem:[#allocation3 + $0x240] sm:$0xff]
        %v310 = vld [vmem:[#allocation3 + $0x248] sm:$0xff]
        %v311 = vld [vmem:[#allocation3 + $0x250] sm:$0xff]
        %v312 = vld [vmem:[#allocation3 + $0x258] sm:$0xff]
        %v313 = vld [vmem:[#allocation3 + $0x260] sm:$0xff]
        %v314 = vld [vmem:[#allocation3 + $0x268] sm:$0xff]
        %v315 = vld [vmem:[#allocation3 + $0x270] sm:$0xff]
        %v316 = vld [vmem:[#allocation3 + $0x278] sm:$0xff]
        %v317 = vld [vmem:[#allocation3 + $0x280] sm:$0xff]
        %v318 = vld [vmem:[#allocation3 + $0x288] sm:$0xff]
        %v319 = vld [vmem:[#allocation3 + $0x290] sm:$0xff]
        %v320 = vld [vmem:[#allocation3 + $0x298] sm:$0xff]
        %v321 = vld [vmem:[#allocation3 + $0x2a0] sm:$0xff]
        %v322 = vld [vmem:[#allocation3 + $0x2a8] sm:$0xff]
        %v323 = vld [vmem:[#allocation3 + $0x2b0] sm:$0xff]
        %v324 = vld [vmem:[#allocation3 + $0x2b8] sm:$0xff]
        %v325 = vld [vmem:[#allocation3 + $0x2c0] sm:$0xff]
        %v326 = vld [vmem:[#allocation3 + $0x2c8] sm:$0xff]
        %v327 = vld [vmem:[#allocation3 + $0x2d0] sm:$0xff]
        %v328 = vld [vmem:[#allocation3 + $0x2d8] sm:$0xff]
        %v329 = vld [vmem:[#allocation3 + $0x2e0] sm:$0xff]
        %v330 = vld [vmem:[#allocation3 + $0x2e8] sm:$0xff]
        %v331 = vld [vmem:[#allocation3 + $0x2f0] sm:$0xff]
        %v332 = vld [vmem:[#allocation3 + $0x2f8] sm:$0xff]
        %v333 = vld [vmem:[#allocation3 + $0x300] sm:$0xff]
        %v334 = vld [vmem:[#allocation3 + $0x308] sm:$0xff]
        %v335 = vld [vmem:[#allocation3 + $0x310] sm:$0xff]
        %v336 = vld [vmem:[#allocation3 + $0x318] sm:$0xff]
        %v337 = vld [vmem:[#allocation3 + $0x320] sm:$0xff]
        %v338 = vld [vmem:[#allocation3 + $0x328] sm:$0xff]
        %v339 = vld [vmem:[#allocation3 + $0x330] sm:$0xff]
        %v340 = vld [vmem:[#allocation3 + $0x338] sm:$0xff]
        %v341 = vld [vmem:[#allocation3 + $0x340] sm:$0xff]
        %v342 = vld [vmem:[#allocation3 + $0x348] sm:$0xff]
        %v343 = vld [vmem:[#allocation3 + $0x350] sm:$0xff]
        %v344 = vld [vmem:[#allocation3 + $0x358] sm:$0xff]
        %v345 = vld [vmem:[#allocation3 + $0x360] sm:$0xff]
        %v346 = vld [vmem:[#allocation3 + $0x368] sm:$0xff]
        %v347 = vld [vmem:[#allocation3 + $0x370] sm:$0xff]
        %v348 = vld [vmem:[#allocation3 + $0x378] sm:$0xff]
        %v349 = vld [vmem:[#allocation3 + $0x380] sm:$0xff]
        %v350 = vld [vmem:[#allocation3 + $0x388] sm:$0xff]
        %v351 = vld [vmem:[#allocation3 + $0x390] sm:$0xff]
        %v352 = vld [vmem:[#allocation3 + $0x398] sm:$0xff]
        %v353 = vld [vmem:[#allocation3 + $0x3a0] sm:$0xff]
        %v354 = vld [vmem:[#allocation3 + $0x3a8] sm:$0xff]
        %v355 = vld [vmem:[#allocation3 + $0x3b0] sm:$0xff]
        %v356 = vld [vmem:[#allocation3 + $0x3b8] sm:$0xff]
        %v357 = vld [vmem:[#allocation3 + $0x3c0] sm:$0xff]
        %v358 = vld [vmem:[#allocation3 + $0x3c8] sm:$0xff]
        %v359 = vld [vmem:[#allocation3 + $0x3d0] sm:$0xff]
        %v360 = vld [vmem:[#allocation3 + $0x3d8] sm:$0xff]
        %v361 = vld [vmem:[#allocation3 + $0x3e0] sm:$0xff]
        %v362 = vld [vmem:[#allocation3 + $0x3e8] sm:$0xff]
        %v363 = vld [vmem:[#allocation3 + $0x3f0] sm:$0xff]
        %v364 = vld [vmem:[#allocation3 + $0x3f8] sm:$0xff]
        %v366 = vunpack.c.l.b16 %v236
        %v367 = vunpack.c.h.b16 %v236
        %v368 = vpack.c.b16 %v366, %v366
        %v369 = vpack.c.b16 %v367, %v367
        %v500 = vunpack.c.l.b16 %v237
        %v501 = vunpack.c.h.b16 %v237
        %v502 = vunpack.c.l.b16 %v238
        %v503 = vunpack.c.h.b16 %v238
        %v504 = vunpack.c.l.b16 %v239
        %v505 = vunpack.c.h.b16 %v239
        %v506 = vunpack.c.l.b16 %v240
        %v507 = vunpack.c.h.b16 %v240
        %v508 = vunpack.c.l.b16 %v241
        %v509 = vunpack.c.h.b16 %v241
        %v510 = vunpack.c.l.b16 %v242
        %v511 = vunpack.c.h.b16 %v242
        %v512 = vunpack.c.l.b16 %v243
        %v513 = vunpack.c.h.b16 %v243
        %v514 = vunpack.c.l.b16 %v244
        %v515 = vunpack.c.h.b16 %v244
        %v516 = vunpack.c.l.b16 %v245
        %v517 = vunpack.c.h.b16 %v245
        %v518 = vunpack.c.l.b16 %v246
        %v519 = vunpack.c.h.b16 %v246
        %v520 = vunpack.c.l.b16 %v247
        %v521 = vunpack.c.h.b16 %v247
        %v522 = vunpack.c.l.b16 %v248
        %v523 = vunpack.c.h.b16 %v248
        %v524 = vunpack.c.l.b16 %v249
        %v525 = vunpack.c.h.b16 %v249
        %v526 = vunpack.c.l.b16 %v250
        %v527 = vunpack.c.h.b16 %v250
        %v528 = vunpack.c.l.b16 %v251
        %v529 = vunpack.c.h.b16 %v251
        %v530 = vunpack.c.l.b16 %v252
        %v531 = vunpack.c.h.b16 %v252
        %v532 = vunpack.c.l.b16 %v253
        %v533 = vunpack.c.h.b16 %v253
        %v534 = vunpack.c.l.b16 %v254
        %v535 = vunpack.c.h.b16 %v254
        %v536 = vunpack.c.l.b16 %v255
        %v537 = vunpack.c.h.b16 %v255
        %v538 = vunpack.c.l.b16 %v256
        %v539 = vunpack.c.h.b16 %v256
        %v540 = vunpack.c.l.b16 %v257
        %v541 = vunpack.c.h.b16 %v257
        %v542 = vunpack.c.l.b16 %v258
        %v543 = vunpack.c.h.b16 %v258
        %v544 = vunpack.c.l.b16 %v259
        %v545 = vunpack.c.h.b16 %v259
        %v546 = vunpack.c.l.b16 %v260
        %v547 = vunpack.c.h.b16 %v260
        %v548 = vunpack.c.l.b16 %v261
        %v549 = vunpack.c.h.b16 %v261
        %v550 = vunpack.c.l.b16 %v262
        %v551 = vunpack.c.h.b16 %v262
        %v552 = vunpack.c.l.b16 %v263
        %v553 = vunpack.c.h.b16 %v263
        %v554 = vunpack.c.l.b16 %v264
        %v555 = vunpack.c.h.b16 %v264
        %v556 = vunpack.c.l.b16 %v265
        %v557 = vunpack.c.h.b16 %v265
        %v558 = vunpack.c.l.b16 %v266
        %v559 = vunpack.c.h.b16 %v266
        %v560 = vunpack.c.l.b16 %v267
        %v561 = vunpack.c.h.b16 %v267
        %v562 = vunpack.c.l.b16 %v268
        %v563 = vunpack.c.h.b16 %v268
        %v564 = vunpack.c.l.b16 %v269
        %v565 = vunpack.c.h.b16 %v269
        %v566 = vunpack.c.l.b16 %v270
        %v567 = vunpack.c.h.b16 %v270
        %v568 = vunpack.c.l.b16 %v271
        %v569 = vunpack.c.h.b16 %v271
        %v570 = vunpack.c.l.b16 %v272
        %v571 = vunpack.c.h.b16 %v272
        %v572 = vunpack.c.l.b16 %v273
        %v573 = vunpack.c.h.b16 %v273
        %v574 = vunpack.c.l.b16 %v274
        %v575 = vunpack.c.h.b16 %v274
        %v576 = vunpack.c.l.b16 %v275
        %v577 = vunpack.c.h.b16 %v275
        %v578 = vunpack.c.l.b16 %v276
        %v579 = vunpack.c.h.b16 %v276
        %v580 = vunpack.c.l.b16 %v277
        %v581 = vunpack.c.h.b16 %v277
        %v582 = vunpack.c.l.b16 %v278
        %v583 = vunpack.c.h.b16 %v278
        %v584 = vunpack.c.l.b16 %v279
        %v585 = vunpack.c.h.b16 %v279
        %v586 = vunpack.c.l.b16 %v280
        %v587 = vunpack.c.h.b16 %v280
        %v588 = vunpack.c.l.b16 %v281
        %v589 = vunpack.c.h.b16 %v281
        %v590 = vunpack.c.l.b16 %v282
        %v591 = vunpack.c.h.b16 %v282
        %v592 = vunpack.c.l.b16 %v283
        %v593 = vunpack.c.h.b16 %v283
        %v594 = vunpack.c.l.b16 %v284
        %v595 = vunpack.c.h.b16 %v284
        %v596 = vunpack.c.l.b16 %v285
        %v597 = vunpack.c.h.b16 %v285
        %v598 = vunpack.c.l.b16 %v286
        %v599 = vunpack.c.h.b16 %v286
        %v600 = vunpack.c.l.b16 %v287
        %v601 = vunpack.c.h.b16 %v287
        %v602 = vunpack.c.l.b16 %v288
        %v603 = vunpack.c.h.b16 %v288
        %v604 = vunpack.c.l.b16 %v289
        %v605 = vunpack.c.h.b16 %v289
        %v606 = vunpack.c.l.b16 %v290
        %v607 = vunpack.c.h.b16 %v290
        %v608 = vunpack.c.l.b16 %v291
        %v609 = vunpack.c.h.b16 %v291
        %v610 = vunpack.c.l.b16 %v292
        %v611 = vunpack.c.h.b16 %v292
        %v612 = vunpack.c.l.b16 %v293
        %v613 = vunpack.c.h.b16 %v293
        %v614 = vunpack.c.l.b16 %v294
        %v615 = vunpack.c.h.b16 %v294
        %v616 = vunpack.c.l.b16 %v295
        %v617 = vunpack.c.h.b16 %v295
        %v618 = vunpack.c.l.b16 %v296
        %v619 = vunpack.c.h.b16 %v296
        %v620 = vunpack.c.l.b16 %v297
        %v621 = vunpack.c.h.b16 %v297
        %v622 = vunpack.c.l.b16 %v298
        %v623 = vunpack.c.h.b16 %v298
        %v624 = vunpack.c.l.b16 %v299
        %v625 = vunpack.c.h.b16 %v299
        %v626 = vunpack.c.l.b16 %v300
        %v627 = vunpack.c.h.b16 %v300
        %v628 = vunpack.c.l.b16 %v301
        %v629 = vunpack.c.h.b16 %v301
        %v630 = vunpack.c.l.b16 %v302
        %v631 = vunpack.c.h.b16 %v302
        %v632 = vunpack.c.l.b16 %v303
        %v633 = vunpack.c.h.b16 %v303
        %v634 = vunpack.c.l.b16 %v304
        %v635 = vunpack.c.h.b16 %v304
        %v636 = vunpack.c.l.b16 %v305
        %v637 = vunpack.c.h.b16 %v305
        %v638 = vunpack.c.l.b16 %v306
        %v639 = vunpack.c.h.b16 %v306
        %v640 = vunpack.c.l.b16 %v307
        %v641 = vunpack.c.h.b16 %v307
        %v642 = vunpack.c.l.b16 %v308
        %v643 = vunpack.c.h.b16 %v308
        %v644 = vunpack.c.l.b16 %v309
        %v645 = vunpack.c.h.b16 %v309
        %v646 = vunpack.c.l.b16 %v310
        %v647 = vunpack.c.h.b16 %v310
        %v648 = vunpack.c.l.b16 %v311
        %v649 = vunpack.c.h.b16 %v311
        %v650 = vunpack.c.l.b16 %v312
        %v651 = vunpack.c.h.b16 %v312
        %v652 = vunpack.c.l.b16 %v313
        %v653 = vunpack.c.h.b16 %v313
        %v654 = vunpack.c.l.b16 %v314
        %v655 = vunpack.c.h.b16 %v314
        %v656 = vunpack.c.l.b16 %v315
        %v657 = vunpack.c.h.b16 %v315
        %v658 = vunpack.c.l.b16 %v316
        %v659 = vunpack.c.h.b16 %v316
        %v660 = vunpack.c.l.b16 %v317
        %v661 = vunpack.c.h.b16 %v317
        %v662 = vunpack.c.l.b16 %v318
        %v663 = vunpack.c.h.b16 %v318
        %v664 = vunpack.c.l.b16 %v319
        %v665 = vunpack.c.h.b16 %v319
        %v666 = vunpack.c.l.b16 %v320
        %v667 = vunpack.c.h.b16 %v320
        %v668 = vunpack.c.l.b16 %v321
        %v669 = vunpack.c.h.b16 %v321
        %v670 = vunpack.c.l.b16 %v322
        %v671 = vunpack.c.h.b16 %v322
        %v672 = vunpack.c.l.b16 %v323
        %v673 = vunpack.c.h.b16 %v323
        %v674 = vunpack.c.l.b16 %v324
        %v675 = vunpack.c.h.b16 %v324
        %v676 = vunpack.c.l.b16 %v325
        %v677 = vunpack.c.h.b16 %v325
        %v678 = vunpack.c.l.b16 %v326
        %v679 = vunpack.c.h.b16 %v326
        %v680 = vunpack.c.l.b16 %v327
        %v681 = vunpack.c.h.b16 %v327
        %v682 = vunpack.c.l.b16 %v328
        %v683 = vunpack.c.h.b16 %v328
        %v684 = vunpack.c.l.b16 %v329
        %v685 = vunpack.c.h.b16 %v329
        %v686 = vunpack.c.l.b16 %v330
        %v687 = vunpack.c.h.b16 %v330
        %v688 = vunpack.c.l.b16 %v331
        %v689 = vunpack.c.h.b16 %v331
        %v690 = vunpack.c.l.b16 %v332
        %v691 = vunpack.c.h.b16 %v332
        %v692 = vunpack.c.l.b16 %v333
        %v693 = vunpack.c.h.b16 %v333
        %v694 = vunpack.c.l.b16 %v334
        %v695 = vunpack.c.h.b16 %v334
        %v696 = vunpack.c.l.b16 %v335
        %v697 = vunpack.c.h.b16 %v335
        %v698 = vunpack.c.l.b16 %v336
        %v699 = vunpack.c.h.b16 %v336
        %v700 = vunpack.c.l.b16 %v337
        %v701 = vunpack.c.h.b16 %v337
        %v702 = vunpack.c.l.b16 %v338
        %v703 = vunpack.c.h.b16 %v338
        %v704 = vunpack.c.l.b16 %v339
        %v705 = vunpack.c.h.b16 %v339
        %v706 = vunpack.c.l.b16 %v340
        %v707 = vunpack.c.h.b16 %v340
        %v708 = vunpack.c.l.b16 %v341
        %v709 = vunpack.c.h.b16 %v341
        %v710 = vunpack.c.l.b16 %v342
        %v711 = vunpack.c.h.b16 %v342
        %v712 = vunpack.c.l.b16 %v343
        %v713 = vunpack.c.h.b16 %v343
        %v714 = vunpack.c.l.b16 %v344
        %v715 = vunpack.c.h.b16 %v344
        %v716 = vunpack.c.l.b16 %v345
        %v717 = vunpack.c.h.b16 %v345
        %v718 = vunpack.c.l.b16 %v346
        %v719 = vunpack.c.h.b16 %v346
        %v720 = vunpack.c.l.b16 %v347
        %v721 = vunpack.c.h.b16 %v347
        %v722 = vunpack.c.l.b16 %v348
        %v723 = vunpack.c.h.b16 %v348
        %v724 = vunpack.c.l.b16 %v349
        %v725 = vunpack.c.h.b16 %v349
        %v726 = vunpack.c.l.b16 %v350
        %v727 = vunpack.c.h.b16 %v350
        %v728 = vunpack.c.l.b16 %v351
        %v729 = vunpack.c.h.b16 %v351
        %v730 = vunpack.c.l.b16 %v352
        %v731 = vunpack.c.h.b16 %v352
        %v732 = vunpack.c.l.b16 %v353
        %v733 = vunpack.c.h.b16 %v353
        %v734 = vunpack.c.l.b16 %v354
        %v735 = vunpack.c.h.b16 %v354
        %v736 = vunpack.c.l.b16 %v355
        %v737 = vunpack.c.h.b16 %v355
        %v738 = vunpack.c.l.b16 %v356
        %v739 = vunpack.c.h.b16 %v356
        %v740 = vunpack.c.l.b16 %v357
        %v741 = vunpack.c.h.b16 %v357
        %v742 = vunpack.c.l.b16 %v358
        %v743 = vunpack.c.h.b16 %v358
        %v744 = vunpack.c.l.b16 %v359
        %v745 = vunpack.c.h.b16 %v359
        %v746 = vunpack.c.l.b16 %v360
        %v747 = vunpack.c.h.b16 %v360
        %v748 = vunpack.c.l.b16 %v361
        %v749 = vunpack.c.h.b16 %v361
        %v750 = vunpack.c.l.b16 %v362
        %v751 = vunpack.c.h.b16 %v362
        %v752 = vunpack.c.l.b16 %v363
        %v753 = vunpack.c.h.b16 %v363
        %v754 = vunpack.c.l.b16 %v364
        %v755 = vunpack.c.h.b16 %v364
        %v756 = vpack.c.b16 %v508, %v500
        %v757 = vpack.c.b16 %v509, %v501
        %v758 = vpack.c.b16 %v510, %v502
        %v759 = vpack.c.b16 %v511, %v503
        %v760 = vpack.c.b16 %v512, %v504
        %v761 = vpack.c.b16 %v513, %v505
        %v762 = vpack.c.b16 %v514, %v506
        %v763 = vpack.c.b16 %v515, %v507
        %v764 = vpack.c.b16 %v524, %v516
        %v765 = vpack.c.b16 %v525, %v517
        %v766 = vpack.c.b16 %v526, %v518
        %v767 = vpack.c.b16 %v527, %v519
        %v768 = vpack.c.b16 %v528, %v520
        %v769 = vpack.c.b16 %v529, %v521
        %v770 = vpack.c.b16 %v530, %v522
        %v771 = vpack.c.b16 %v531, %v523
        %v772 = vpack.c.b16 %v540, %v532
        %v773 = vpack.c.b16 %v541, %v533
        %v774 = vpack.c.b16 %v542, %v534
        %v775 = vpack.c.b16 %v543, %v535
        %v776 = vpack.c.b16 %v544, %v536
        %v777 = vpack.c.b16 %v545, %v537
        %v778 = vpack.c.b16 %v546, %v538
        %v779 = vpack.c.b16 %v547, %v539
        %v780 = vpack.c.b16 %v556, %v548
        %v781 = vpack.c.b16 %v557, %v549
        %v782 = vpack.c.b16 %v558, %v550
        %v783 = vpack.c.b16 %v559, %v551
        %v784 = vpack.c.b16 %v560, %v552
        %v785 = vpack.c.b16 %v561, %v553
        %v786 = vpack.c.b16 %v562, %v554
        %v787 = vpack.c.b16 %v563, %v555
        %v788 = vpack.c.b16 %v572, %v564
        %v789 = vpack.c.b16 %v573, %v565
        %v790 = vpack.c.b16 %v574, %v566
        %v791 = vpack.c.b16 %v575, %v567
        %v792 = vpack.c.b16 %v576, %v568
        %v793 = vpack.c.b16 %v577, %v569
        %v794 = vpack.c.b16 %v578, %v570
        %v795 = vpack.c.b16 %v579, %v571
        %v796 = vpack.c.b16 %v588, %v580
        %v797 = vpack.c.b16 %v589, %v581
        %v798 = vpack.c.b16 %v590, %v582
        %v799 = vpack.c.b16 %v591, %v583
        %v800 = vpack.c.b16 %v592, %v584
        %v801 = vpack.c.b16 %v593, %v585
        %v802 = vpack.c.b16 %v594, %v586
        %v803 = vpack.c.b16 %v595, %v587
        %v804 = vpack.c.b16 %v604, %v596
        %v805 = vpack.c.b16 %v605, %v597
        %v806 = vpack.c.b16 %v606, %v598
        %v807 = vpack.c.b16 %v607, %v599
        %v808 = vpack.c.b16 %v608, %v600
        %v809 = vpack.c.b16 %v609, %v601
        %v810 = vpack.c.b16 %v610, %v602
        %v811 = vpack.c.b16 %v611, %v603
        %v812 = vpack.c.b16 %v620, %v612
        %v813 = vpack.c.b16 %v621, %v613
        %v814 = vpack.c.b16 %v622, %v614
        %v815 = vpack.c.b16 %v623, %v615
        %v816 = vpack.c.b16 %v624, %v616
        %v817 = vpack.c.b16 %v625, %v617
        %v818 = vpack.c.b16 %v626, %v618
        %v819 = vpack.c.b16 %v627, %v619
        %v820 = vpack.c.b16 %v636, %v628
        %v821 = vpack.c.b16 %v637, %v629
        %v822 = vpack.c.b16 %v638, %v630
        %v823 = vpack.c.b16 %v639, %v631
        %v824 = vpack.c.b16 %v640, %v632
        %v825 = vpack.c.b16 %v641, %v633
        %v826 = vpack.c.b16 %v642, %v634
        %v827 = vpack.c.b16 %v643, %v635
        %v828 = vpack.c.b16 %v652, %v644
        %v829 = vpack.c.b16 %v653, %v645
        %v830 = vpack.c.b16 %v654, %v646
        %v831 = vpack.c.b16 %v655, %v647
        %v832 = vpack.c.b16 %v656, %v648
        %v833 = vpack.c.b16 %v657, %v649
        %v834 = vpack.c.b16 %v658, %v650
        %v835 = vpack.c.b16 %v659, %v651
        %v836 = vpack.c.b16 %v668, %v660
        %v837 = vpack.c.b16 %v669, %v661
        %v838 = vpack.c.b16 %v670, %v662
        %v839 = vpack.c.b16 %v671, %v663
        %v840 = vpack.c.b16 %v672, %v664
        %v841 = vpack.c.b16 %v673, %v665
        %v842 = vpack.c.b16 %v674, %v666
        %v843 = vpack.c.b16 %v675, %v667
        %v844 = vpack.c.b16 %v684, %v676
        %v845 = vpack.c.b16 %v685, %v677
        %v846 = vpack.c.b16 %v686, %v678
        %v847 = vpack.c.b16 %v687, %v679
        %v848 = vpack.c.b16 %v688, %v680
        %v849 = vpack.c.b16 %v689, %v681
        %v850 = vpack.c.b16 %v690, %v682
        %v851 = vpack.c.b16 %v691, %v683
        %v852 = vpack.c.b16 %v700, %v692
        %v853 = vpack.c.b16 %v701, %v693
        %v854 = vpack.c.b16 %v702, %v694
        %v855 = vpack.c.b16 %v703, %v695
        %v856 = vpack.c.b16 %v704, %v696
        %v857 = vpack.c.b16 %v705, %v697
        %v858 = vpack.c.b16 %v706, %v698
        %v859 = vpack.c.b16 %v707, %v699
        %v860 = vpack.c.b16 %v716, %v708
        %v861 = vpack.c.b16 %v717, %v709
        %v862 = vpack.c.b16 %v718, %v710
        %v863 = vpack.c.b16 %v719, %v711
        %v864 = vpack.c.b16 %v720, %v712
        %v865 = vpack.c.b16 %v721, %v713
        %v866 = vpack.c.b16 %v722, %v714
        %v867 = vpack.c.b16 %v723, %v715
        %v868 = vpack.c.b16 %v732, %v724
        %v869 = vpack.c.b16 %v733, %v725
        %v870 = vpack.c.b16 %v734, %v726
        %v871 = vpack.c.b16 %v735, %v727
        %v872 = vpack.c.b16 %v736, %v728
        %v873 = vpack.c.b16 %v737, %v729
        %v874 = vpack.c.b16 %v738, %v730
        %v875 = vpack.c.b16 %v739, %v731
        %v876 = vpack.c.b16 %v748, %v740
        %v877 = vpack.c.b16 %v749, %v741
        %v878 = vpack.c.b16 %v750, %v742
        %v879 = vpack.c.b16 %v751, %v743
        %v880 = vpack.c.b16 %v752, %v744
        %v881 = vpack.c.b16 %v753, %v745
        %v882 = vpack.c.b16 %v754, %v746
        %v883 = vpack.c.b16 %v755, %v747
        %1012 = vmatprep.subr.bf16.mxu0 %v813
        %1013 = vmatpush1.bf16.msra.mxu0 %v812
        %1014 = vmatprep.subr.bf16.mxu0 %v805
        %1015 = vmatpush1.bf16.msra.mxu0 %v804
        %1016 = vmatprep.subr.bf16.mxu0 %v797
        %1017 = vmatpush1.bf16.msra.mxu0 %v796
        %1018 = vmatprep.subr.bf16.mxu0 %v789
        %1019 = vmatpush1.bf16.msra.mxu0 %v788
        %1020 = vmatprep.subr.bf16.mxu0 %v781
        %1021 = vmatpush1.bf16.msra.mxu0 %v780
        %1022 = vmatprep.subr.bf16.mxu0 %v773
        %1023 = vmatpush1.bf16.msra.mxu0 %v772
        %1024 = vmatprep.subr.bf16.mxu0 %v765
        %1025 = vmatpush1.bf16.msra.mxu0 %v764
        %1026 = vmatprep.subr.bf16.mxu0 %v757
        %1027 = vmatpush1.bf16.msra.mxu0 %v756
        %1028 = vmatprep.subr.bf16.mxu0 %v877
        %1029 = vmatpush2.bf16.msra.mxu0 %v876
        %1030 = vmatprep.subr.bf16.mxu0 %v869
        %1031 = vmatpush2.bf16.msra.mxu0 %v868
        %1032 = vmatprep.subr.bf16.mxu0 %v861
        %1033 = vmatpush2.bf16.msra.mxu0 %v860
        %1034 = vmatprep.subr.bf16.mxu0 %v853
        %1035 = vmatpush2.bf16.msra.mxu0 %v852
        %1036 = vmatprep.subr.bf16.mxu0 %v845
        %1037 = vmatpush2.bf16.msra.mxu0 %v844
        %1038 = vmatprep.subr.bf16.mxu0 %v837
        %1039 = vmatpush2.bf16.msra.mxu0 %v836
        %1040 = vmatprep.subr.bf16.mxu0 %v829
        %1041 = vmatpush2.bf16.msra.mxu0 %v828
        %1042 = vmatprep.subr.bf16.mxu0 %v821
        %1043 = vmatpush2.bf16.msra.mxu0 %v820
        %1044 = vmatprep.mubr.bf16.mxu0 %v369
        %1045 = vmatmul.mubr.bf16.gmra.mxu0 %v368
        %v1046 = vpop.f32.mrf.mxu0
        %v1047 = vadd.f32 0.0, %v1046
        %v1048 = vpop.f32.mrf.mxu0
        %v1049 = vadd.f32 0.0, %v1048
        %v1050 = vpop.f32.mrf.mxu0
        %v1051 = vpop.f32.mrf.mxu0
        %1052 = vdwg.mxu0
        %1053 = vmatprep.subr.bf16.mxu0 %v815
        %1054 = vmatpush1.bf16.msra.mxu0 %v814
        %1055 = vmatprep.subr.bf16.mxu0 %v807
        %1056 = vmatpush1.bf16.msra.mxu0 %v806
        %1057 = vmatprep.subr.bf16.mxu0 %v799
        %1058 = vmatpush1.bf16.msra.mxu0 %v798
        %1059 = vmatprep.subr.bf16.mxu0 %v791
        %1060 = vmatpush1.bf16.msra.mxu0 %v790
        %1061 = vmatprep.subr.bf16.mxu0 %v783
        %1062 = vmatpush1.bf16.msra.mxu0 %v782
        %1063 = vmatprep.subr.bf16.mxu0 %v775
        %1064 = vmatpush1.bf16.msra.mxu0 %v774
        %1065 = vmatprep.subr.bf16.mxu0 %v767
        %1066 = vmatpush1.bf16.msra.mxu0 %v766
        %1067 = vmatprep.subr.bf16.mxu0 %v759
        %1068 = vmatpush1.bf16.msra.mxu0 %v758
        %1069 = vmatprep.subr.bf16.mxu0 %v879
        %1070 = vmatpush2.bf16.msra.mxu0 %v878
        %1071 = vmatprep.subr.bf16.mxu0 %v871
        %1072 = vmatpush2.bf16.msra.mxu0 %v870
        %1073 = vmatprep.subr.bf16.mxu0 %v863
        %1074 = vmatpush2.bf16.msra.mxu0 %v862
        %1075 = vmatprep.subr.bf16.mxu0 %v855
        %1076 = vmatpush2.bf16.msra.mxu0 %v854
        %1077 = vmatprep.subr.bf16.mxu0 %v847
        %1078 = vmatpush2.bf16.msra.mxu0 %v846
        %1079 = vmatprep.subr.bf16.mxu0 %v839
        %1080 = vmatpush2.bf16.msra.mxu0 %v838
        %1081 = vmatprep.subr.bf16.mxu0 %v831
        %1082 = vmatpush2.bf16.msra.mxu0 %v830
        %1083 = vmatprep.subr.bf16.mxu0 %v823
        %1084 = vmatpush2.bf16.msra.mxu0 %v822
        %1085 = vmatprep.mubr.bf16.mxu0 %v369
        %1086 = vmatmul.mubr.bf16.gmra.mxu0 %v368
        %v1087 = vpop.f32.mrf.mxu0
        %v1088 = vadd.f32 0.0, %v1087
        %v1089 = vpop.f32.mrf.mxu0
        %v1090 = vadd.f32 0.0, %v1089
        %v1091 = vpop.f32.mrf.mxu0
        %v1092 = vpop.f32.mrf.mxu0
        %1093 = vdwg.mxu0
        %1094 = vmatprep.subr.bf16.mxu0 %v817
        %1095 = vmatpush1.bf16.msra.mxu0 %v816
        %1096 = vmatprep.subr.bf16.mxu0 %v809
        %1097 = vmatpush1.bf16.msra.mxu0 %v808
        %1098 = vmatprep.subr.bf16.mxu0 %v801
        %1099 = vmatpush1.bf16.msra.mxu0 %v800
        %1100 = vmatprep.subr.bf16.mxu0 %v793
        %1101 = vmatpush1.bf16.msra.mxu0 %v792
        %1102 = vmatprep.subr.bf16.mxu0 %v785
        %1103 = vmatpush1.bf16.msra.mxu0 %v784
        %1104 = vmatprep.subr.bf16.mxu0 %v777
        %1105 = vmatpush1.bf16.msra.mxu0 %v776
        %1106 = vmatprep.subr.bf16.mxu0 %v769
        %1107 = vmatpush1.bf16.msra.mxu0 %v768
        %1108 = vmatprep.subr.bf16.mxu0 %v761
        %1109 = vmatpush1.bf16.msra.mxu0 %v760
        %1110 = vmatprep.subr.bf16.mxu0 %v881
        %1111 = vmatpush2.bf16.msra.mxu0 %v880
        %1112 = vmatprep.subr.bf16.mxu0 %v873
        %1113 = vmatpush2.bf16.msra.mxu0 %v872
        %1114 = vmatprep.subr.bf16.mxu0 %v865
        %1115 = vmatpush2.bf16.msra.mxu0 %v864
        %1116 = vmatprep.subr.bf16.mxu0 %v857
        %1117 = vmatpush2.bf16.msra.mxu0 %v856
        %1118 = vmatprep.subr.bf16.mxu0 %v849
        %1119 = vmatpush2.bf16.msra.mxu0 %v848
        %1120 = vmatprep.subr.bf16.mxu0 %v841
        %1121 = vmatpush2.bf16.msra.mxu0 %v840
        %1122 = vmatprep.subr.bf16.mxu0 %v833
        %1123 = vmatpush2.bf16.msra.mxu0 %v832
        %1124 = vmatprep.subr.bf16.mxu0 %v825
        %1125 = vmatpush2.bf16.msra.mxu0 %v824
        %1126 = vmatprep.mubr.bf16.mxu0 %v369
        %1127 = vmatmul.mubr.bf16.gmra.mxu0 %v368
        %v1128 = vpop.f32.mrf.mxu0
        %v1129 = vadd.f32 0.0, %v1128
        %v1130 = vpop.f32.mrf.mxu0
        %v1131 = vadd.f32 0.0, %v1130
        %v1132 = vpop.f32.mrf.mxu0
        %v1133 = vpop.f32.mrf.mxu0
        %1134 = vdwg.mxu0
        %1135 = vmatprep.subr.bf16.mxu0 %v819
        %1136 = vmatpush1.bf16.msra.mxu0 %v818
        %1137 = vmatprep.subr.bf16.mxu0 %v811
        %1138 = vmatpush1.bf16.msra.mxu0 %v810
        %1139 = vmatprep.subr.bf16.mxu0 %v803
        %1140 = vmatpush1.bf16.msra.mxu0 %v802
        %1141 = vmatprep.subr.bf16.mxu0 %v795
        %1142 = vmatpush1.bf16.msra.mxu0 %v794
        %1143 = vmatprep.subr.bf16.mxu0 %v787
        %1144 = vmatpush1.bf16.msra.mxu0 %v786
        %1145 = vmatprep.subr.bf16.mxu0 %v779
        %1146 = vmatpush1.bf16.msra.mxu0 %v778
        %1147 = vmatprep.subr.bf16.mxu0 %v771
        %1148 = vmatpush1.bf16.msra.mxu0 %v770
        %1149 = vmatprep.subr.bf16.mxu0 %v763
        %1150 = vmatpush1.bf16.msra.mxu0 %v762
        %1151 = vmatprep.subr.bf16.mxu0 %v883
        %1152 = vmatpush2.bf16.msra.mxu0 %v882
        %1153 = vmatprep.subr.bf16.mxu0 %v875
        %1154 = vmatpush2.bf16.msra.mxu0 %v874
        %1155 = vmatprep.subr.bf16.mxu0 %v867
        %1156 = vmatpush2.bf16.msra.mxu0 %v866
        %1157 = vmatprep.subr.bf16.mxu0 %v859
        %1158 = vmatpush2.bf16.msra.mxu0 %v858
        %1159 = vmatprep.subr.bf16.mxu0 %v851
        %1160 = vmatpush2.bf16.msra.mxu0 %v850
        %1161 = vmatprep.subr.bf16.mxu0 %v843
        %1162 = vmatpush2.bf16.msra.mxu0 %v842
        %1163 = vmatprep.subr.bf16.mxu0 %v835
        %1164 = vmatpush2.bf16.msra.mxu0 %v834
        %1165 = vmatprep.subr.bf16.mxu0 %v827
        %1166 = vmatpush2.bf16.msra.mxu0 %v826
        %1167 = vmatprep.mubr.bf16.mxu0 %v369
        %1168 = vmatmul.mubr.bf16.gmra.mxu0 %v368
        %v1169 = vpop.f32.mrf.mxu0
        %v1170 = vadd.f32 0.0, %v1169
        %v1171 = vpop.f32.mrf.mxu0
        %v1172 = vadd.f32 0.0, %v1171
        %v1173 = vpop.f32.mrf.mxu0
        %v1174 = vpop.f32.mrf.mxu0
        %1175 = vdwg.mxu0
        %v1176 = vmul.f32 %v1047, 0.5
        %v1177 = vmul.f32 %v1049, 0.5
        %v1178 = vmul.f32 %v1088, 0.5
        %v1179 = vmul.f32 %v1090, 0.5
        %v1180 = vmul.f32 %v1047, 0.044715
        %v1181 = vmul.f32 %v1049, 0.044715
        %v1182 = vmul.f32 %v1088, 0.044715
        %v1183 = vmul.f32 %v1090, 0.044715
        %v1184 = vmul.f32 %v1180, %v1047
        %v1185 = vmul.f32 %v1181, %v1049
        %v1186 = vmul.f32 %v1182, %v1088
        %v1187 = vmul.f32 %v1183, %v1090
        %v1188 = vmul.f32 %v1184, %v1047
        %v1189 = vmul.f32 %v1185, %v1049
        %v1190 = vmul.f32 %v1186, %v1088
        %v1191 = vmul.f32 %v1187, %v1090
        %v1192 = vadd.f32 %v1047, %v1188
        %v1193 = vadd.f32 %v1049, %v1189
        %v1194 = vadd.f32 %v1088, %v1190
        %v1195 = vadd.f32 %v1090, %v1191
        %v1196 = vmul.f32 %v1192, 0.7978846
        %v1197 = vmul.f32 %v1193, 0.7978846
        %v1198 = vmul.f32 %v1194, 0.7978846
        %v1199 = vmul.f32 %v1195, 0.7978846
        %v1200 = vtanh.pop %v1196
        %v1201 = vtanh.pop %v1197
        %v1202 = vtanh.pop %v1198
        %v1203 = vtanh.pop %v1199
        %v1204 = vadd.f32 %v1200, 1.0
        %v1205 = vadd.f32 %v1201, 1.0
        %v1206 = vadd.f32 %v1202, 1.0
        %v1207 = vadd.f32 %v1203, 1.0
        %v1208 = vmul.f32 %v1176, %v1204
        %v1209 = vmul.f32 %v1177, %v1205
        %v1210 = vmul.f32 %v1178, %v1206
        %v1211 = vmul.f32 %v1179, %v1207
        %v1212 = vmul.f32 %v1208, %v1129
        %v1213 = vmul.f32 %v1209, %v1131
        %v1214 = vmul.f32 %v1210, %v1170
        %v1215 = vmul.f32 %v1211, %v1172
        %v1216 = vpack.c.bf16 %v1212, %v1212
        %v1217 = vpack.c.bf16 %v1213, %v1213
        %v1218 = vpack.c.bf16 %v1214, %v1214
        %v1219 = vpack.c.bf16 %v1215, %v1215
        %v1220 = vld [vmem:[#allocation2] sm:$0xff]
        %v1221 = vld [vmem:[#allocation2 + $0x8] sm:$0xff]
        %v1222 = vld [vmem:[#allocation6] sm:$0xff]
        %v1223 = vld [vmem:[#allocation6 + $0x8] sm:$0xff]
        %v1224 = vld [vmem:[#allocation6 + $0x10] sm:$0xff]
        %v1225 = vld [vmem:[#allocation6 + $0x18] sm:$0xff]
        %v1226 = vld [vmem:[#allocation6 + $0x20] sm:$0xff]
        %v1227 = vld [vmem:[#allocation6 + $0x28] sm:$0xff]
        %v1228 = vld [vmem:[#allocation6 + $0x30] sm:$0xff]
        %v1229 = vld [vmem:[#allocation6 + $0x38] sm:$0xff]
        %v1230 = vld [vmem:[#allocation6 + $0x40] sm:$0xff]
        %v1231 = vld [vmem:[#allocation6 + $0x48] sm:$0xff]
        %v1232 = vld [vmem:[#allocation6 + $0x50] sm:$0xff]
        %v1233 = vld [vmem:[#allocation6 + $0x58] sm:$0xff]
        %v1234 = vld [vmem:[#allocation6 + $0x60] sm:$0xff]
        %v1235 = vld [vmem:[#allocation6 + $0x68] sm:$0xff]
        %v1236 = vld [vmem:[#allocation6 + $0x70] sm:$0xff]
        %v1237 = vld [vmem:[#allocation6 + $0x78] sm:$0xff]
        %v1238 = vld [vmem:[#allocation6 + $0x80] sm:$0xff]
        %v1239 = vld [vmem:[#allocation6 + $0x88] sm:$0xff]
        %v1240 = vld [vmem:[#allocation6 + $0x90] sm:$0xff]
        %v1241 = vld [vmem:[#allocation6 + $0x98] sm:$0xff]
        %v1242 = vld [vmem:[#allocation6 + $0xa0] sm:$0xff]
        %v1243 = vld [vmem:[#allocation6 + $0xa8] sm:$0xff]
        %v1244 = vld [vmem:[#allocation6 + $0xb0] sm:$0xff]
        %v1245 = vld [vmem:[#allocation6 + $0xb8] sm:$0xff]
        %v1246 = vld [vmem:[#allocation6 + $0xc0] sm:$0xff]
        %v1247 = vld [vmem:[#allocation6 + $0xc8] sm:$0xff]
        %v1248 = vld [vmem:[#allocation6 + $0xd0] sm:$0xff]
        %v1249 = vld [vmem:[#allocation6 + $0xd8] sm:$0xff]
        %v1250 = vld [vmem:[#allocation6 + $0xe0] sm:$0xff]
        %v1251 = vld [vmem:[#allocation6 + $0xe8] sm:$0xff]
        %v1252 = vld [vmem:[#allocation6 + $0xf0] sm:$0xff]
        %v1253 = vld [vmem:[#allocation6 + $0xf8] sm:$0xff]
        %v1254 = vld [vmem:[#allocation6 + $0x100] sm:$0xff]
        %v1255 = vld [vmem:[#allocation6 + $0x108] sm:$0xff]
        %v1256 = vld [vmem:[#allocation6 + $0x110] sm:$0xff]
        %v1257 = vld [vmem:[#allocation6 + $0x118] sm:$0xff]
        %v1258 = vld [vmem:[#allocation6 + $0x120] sm:$0xff]
        %v1259 = vld [vmem:[#allocation6 + $0x128] sm:$0xff]
        %v1260 = vld [vmem:[#allocation6 + $0x130] sm:$0xff]
        %v1261 = vld [vmem:[#allocation6 + $0x138] sm:$0xff]
        %v1262 = vld [vmem:[#allocation6 + $0x140] sm:$0xff]
        %v1263 = vld [vmem:[#allocation6 + $0x148] sm:$0xff]
        %v1264 = vld [vmem:[#allocation6 + $0x150] sm:$0xff]
        %v1265 = vld [vmem:[#allocation6 + $0x158] sm:$0xff]
        %v1266 = vld [vmem:[#allocation6 + $0x160] sm:$0xff]
        %v1267 = vld [vmem:[#allocation6 + $0x168] sm:$0xff]
        %v1268 = vld [vmem:[#allocation6 + $0x170] sm:$0xff]
        %v1269 = vld [vmem:[#allocation6 + $0x178] sm:$0xff]
        %v1270 = vld [vmem:[#allocation6 + $0x180] sm:$0xff]
        %v1271 = vld [vmem:[#allocation6 + $0x188] sm:$0xff]
        %v1272 = vld [vmem:[#allocation6 + $0x190] sm:$0xff]
        %v1273 = vld [vmem:[#allocation6 + $0x198] sm:$0xff]
        %v1274 = vld [vmem:[#allocation6 + $0x1a0] sm:$0xff]
        %v1275 = vld [vmem:[#allocation6 + $0x1a8] sm:$0xff]
        %v1276 = vld [vmem:[#allocation6 + $0x1b0] sm:$0xff]
        %v1277 = vld [vmem:[#allocation6 + $0x1b8] sm:$0xff]
        %v1278 = vld [vmem:[#allocation6 + $0x1c0] sm:$0xff]
        %v1279 = vld [vmem:[#allocation6 + $0x1c8] sm:$0xff]
        %v1280 = vld [vmem:[#allocation6 + $0x1d0] sm:$0xff]
        %v1281 = vld [vmem:[#allocation6 + $0x1d8] sm:$0xff]
        %v1282 = vld [vmem:[#allocation6 + $0x1e0] sm:$0xff]
        %v1283 = vld [vmem:[#allocation6 + $0x1e8] sm:$0xff]
        %v1284 = vld [vmem:[#allocation6 + $0x1f0] sm:$0xff]
        %v1285 = vld [vmem:[#allocation6 + $0x1f8] sm:$0xff]
        %v1350 = vunpack.c.l.b16 %v1222
        %v1351 = vunpack.c.h.b16 %v1222
        %v1352 = vunpack.c.l.b16 %v1223
        %v1353 = vunpack.c.h.b16 %v1223
        %v1354 = vunpack.c.l.b16 %v1224
        %v1355 = vunpack.c.h.b16 %v1224
        %v1356 = vunpack.c.l.b16 %v1225
        %v1357 = vunpack.c.h.b16 %v1225
        %v1358 = vunpack.c.l.b16 %v1226
        %v1359 = vunpack.c.h.b16 %v1226
        %v1360 = vunpack.c.l.b16 %v1227
        %v1361 = vunpack.c.h.b16 %v1227
        %v1362 = vunpack.c.l.b16 %v1228
        %v1363 = vunpack.c.h.b16 %v1228
        %v1364 = vunpack.c.l.b16 %v1229
        %v1365 = vunpack.c.h.b16 %v1229
        %v1366 = vunpack.c.l.b16 %v1230
        %v1367 = vunpack.c.h.b16 %v1230
        %v1368 = vunpack.c.l.b16 %v1231
        %v1369 = vunpack.c.h.b16 %v1231
        %v1370 = vunpack.c.l.b16 %v1232
        %v1371 = vunpack.c.h.b16 %v1232
        %v1372 = vunpack.c.l.b16 %v1233
        %v1373 = vunpack.c.h.b16 %v1233
        %v1374 = vunpack.c.l.b16 %v1234
        %v1375 = vunpack.c.h.b16 %v1234
        %v1376 = vunpack.c.l.b16 %v1235
        %v1377 = vunpack.c.h.b16 %v1235
        %v1378 = vunpack.c.l.b16 %v1236
        %v1379 = vunpack.c.h.b16 %v1236
        %v1380 = vunpack.c.l.b16 %v1237
        %v1381 = vunpack.c.h.b16 %v1237
        %v1382 = vunpack.c.l.b16 %v1238
        %v1383 = vunpack.c.h.b16 %v1238
        %v1384 = vunpack.c.l.b16 %v1239
        %v1385 = vunpack.c.h.b16 %v1239
        %v1386 = vunpack.c.l.b16 %v1240
        %v1387 = vunpack.c.h.b16 %v1240
        %v1388 = vunpack.c.l.b16 %v1241
        %v1389 = vunpack.c.h.b16 %v1241
        %v1390 = vunpack.c.l.b16 %v1242
        %v1391 = vunpack.c.h.b16 %v1242
        %v1392 = vunpack.c.l.b16 %v1243
        %v1393 = vunpack.c.h.b16 %v1243
        %v1394 = vunpack.c.l.b16 %v1244
        %v1395 = vunpack.c.h.b16 %v1244
        %v1396 = vunpack.c.l.b16 %v1245
        %v1397 = vunpack.c.h.b16 %v1245
        %v1398 = vunpack.c.l.b16 %v1246
        %v1399 = vunpack.c.h.b16 %v1246
        %v1400 = vunpack.c.l.b16 %v1247
        %v1401 = vunpack.c.h.b16 %v1247
        %v1402 = vunpack.c.l.b16 %v1248
        %v1403 = vunpack.c.h.b16 %v1248
        %v1404 = vunpack.c.l.b16 %v1249
        %v1405 = vunpack.c.h.b16 %v1249
        %v1406 = vunpack.c.l.b16 %v1250
        %v1407 = vunpack.c.h.b16 %v1250
        %v1408 = vunpack.c.l.b16 %v1251
        %v1409 = vunpack.c.h.b16 %v1251
        %v1410 = vunpack.c.l.b16 %v1252
        %v1411 = vunpack.c.h.b16 %v1252
        %v1412 = vunpack.c.l.b16 %v1253
        %v1413 = vunpack.c.h.b16 %v1253
        %v1414 = vunpack.c.l.b16 %v1254
        %v1415 = vunpack.c.h.b16 %v1254
        %v1416 = vunpack.c.l.b16 %v1255
        %v1417 = vunpack.c.h.b16 %v1255
        %v1418 = vunpack.c.l.b16 %v1256
        %v1419 = vunpack.c.h.b16 %v1256
        %v1420 = vunpack.c.l.b16 %v1257
        %v1421 = vunpack.c.h.b16 %v1257
        %v1422 = vunpack.c.l.b16 %v1258
        %v1423 = vunpack.c.h.b16 %v1258
        %v1424 = vunpack.c.l.b16 %v1259
        %v1425 = vunpack.c.h.b16 %v1259
        %v1426 = vunpack.c.l.b16 %v1260
        %v1427 = vunpack.c.h.b16 %v1260
        %v1428 = vunpack.c.l.b16 %v1261
        %v1429 = vunpack.c.h.b16 %v1261
        %v1430 = vunpack.c.l.b16 %v1262
        %v1431 = vunpack.c.h.b16 %v1262
        %v1432 = vunpack.c.l.b16 %v1263
        %v1433 = vunpack.c.h.b16 %v1263
        %v1434 = vunpack.c.l.b16 %v1264
        %v1435 = vunpack.c.h.b16 %v1264
        %v1436 = vunpack.c.l.b16 %v1265
        %v1437 = vunpack.c.h.b16 %v1265
        %v1438 = vunpack.c.l.b16 %v1266
        %v1439 = vunpack.c.h.b16 %v1266
        %v1440 = vunpack.c.l.b16 %v1267
        %v1441 = vunpack.c.h.b16 %v1267
        %v1442 = vunpack.c.l.b16 %v1268
        %v1443 = vunpack.c.h.b16 %v1268
        %v1444 = vunpack.c.l.b16 %v1269
        %v1445 = vunpack.c.h.b16 %v1269
        %v1446 = vunpack.c.l.b16 %v1270
        %v1447 = vunpack.c.h.b16 %v1270
        %v1448 = vunpack.c.l.b16 %v1271
        %v1449 = vunpack.c.h.b16 %v1271
        %v1450 = vunpack.c.l.b16 %v1272
        %v1451 = vunpack.c.h.b16 %v1272
        %v1452 = vunpack.c.l.b16 %v1273
        %v1453 = vunpack.c.h.b16 %v1273
        %v1454 = vunpack.c.l.b16 %v1274
        %v1455 = vunpack.c.h.b16 %v1274
        %v1456 = vunpack.c.l.b16 %v1275
        %v1457 = vunpack.c.h.b16 %v1275
        %v1458 = vunpack.c.l.b16 %v1276
        %v1459 = vunpack.c.h.b16 %v1276
        %v1460 = vunpack.c.l.b16 %v1277
        %v1461 = vunpack.c.h.b16 %v1277
        %v1462 = vunpack.c.l.b16 %v1278
        %v1463 = vunpack.c.h.b16 %v1278
        %v1464 = vunpack.c.l.b16 %v1279
        %v1465 = vunpack.c.h.b16 %v1279
        %v1466 = vunpack.c.l.b16 %v1280
        %v1467 = vunpack.c.h.b16 %v1280
        %v1468 = vunpack.c.l.b16 %v1281
        %v1469 = vunpack.c.h.b16 %v1281
        %v1470 = vunpack.c.l.b16 %v1282
        %v1471 = vunpack.c.h.b16 %v1282
        %v1472 = vunpack.c.l.b16 %v1283
        %v1473 = vunpack.c.h.b16 %v1283
        %v1474 = vunpack.c.l.b16 %v1284
        %v1475 = vunpack.c.h.b16 %v1284
        %v1476 = vunpack.c.l.b16 %v1285
        %v1477 = vunpack.c.h.b16 %v1285
        %v1478 = vpack.c.b16 %v1352, %v1350
        %v1479 = vpack.c.b16 %v1353, %v1351
        %v1480 = vpack.c.b16 %v1356, %v1354
        %v1481 = vpack.c.b16 %v1357, %v1355
        %v1482 = vpack.c.b16 %v1360, %v1358
        %v1483 = vpack.c.b16 %v1361, %v1359
        %v1484 = vpack.c.b16 %v1364, %v1362
        %v1485 = vpack.c.b16 %v1365, %v1363
        %v1486 = vpack.c.b16 %v1368, %v1366
        %v1487 = vpack.c.b16 %v1369, %v1367
        %v1488 = vpack.c.b16 %v1372, %v1370
        %v1489 = vpack.c.b16 %v1373, %v1371
        %v1490 = vpack.c.b16 %v1376, %v1374
        %v1491 = vpack.c.b16 %v1377, %v1375
        %v1492 = vpack.c.b16 %v1380, %v1378
        %v1493 = vpack.c.b16 %v1381, %v1379
        %v1494 = vpack.c.b16 %v1384, %v1382
        %v1495 = vpack.c.b16 %v1385, %v1383
        %v1496 = vpack.c.b16 %v1388, %v1386
        %v1497 = vpack.c.b16 %v1389, %v1387
        %v1498 = vpack.c.b16 %v1392, %v1390
        %v1499 = vpack.c.b16 %v1393, %v1391
        %v1500 = vpack.c.b16 %v1396, %v1394
        %v1501 = vpack.c.b16 %v1397, %v1395
        %v1502 = vpack.c.b16 %v1400, %v1398
        %v1503 = vpack.c.b16 %v1401, %v1399
        %v1504 = vpack.c.b16 %v1404, %v1402
        %v1505 = vpack.c.b16 %v1405, %v1403
        %v1506 = vpack.c.b16 %v1408, %v1406
        %v1507 = vpack.c.b16 %v1409, %v1407
        %v1508 = vpack.c.b16 %v1412, %v1410
        %v1509 = vpack.c.b16 %v1413, %v1411
        %v1510 = vpack.c.b16 %v1416, %v1414
        %v1511 = vpack.c.b16 %v1417, %v1415
        %v1512 = vpack.c.b16 %v1420, %v1418
        %v1513 = vpack.c.b16 %v1421, %v1419
        %v1514 = vpack.c.b16 %v1424, %v1422
        %v1515 = vpack.c.b16 %v1425, %v1423
        %v1516 = vpack.c.b16 %v1428, %v1426
        %v1517 = vpack.c.b16 %v1429, %v1427
        %v1518 = vpack.c.b16 %v1432, %v1430
        %v1519 = vpack.c.b16 %v1433, %v1431
        %v1520 = vpack.c.b16 %v1436, %v1434
        %v1521 = vpack.c.b16 %v1437, %v1435
        %v1522 = vpack.c.b16 %v1440, %v1438
        %v1523 = vpack.c.b16 %v1441, %v1439
        %v1524 = vpack.c.b16 %v1444, %v1442
        %v1525 = vpack.c.b16 %v1445, %v1443
        %v1526 = vpack.c.b16 %v1448, %v1446
        %v1527 = vpack.c.b16 %v1449, %v1447
        %v1528 = vpack.c.b16 %v1452, %v1450
        %v1529 = vpack.c.b16 %v1453, %v1451
        %v1530 = vpack.c.b16 %v1456, %v1454
        %v1531 = vpack.c.b16 %v1457, %v1455
        %v1532 = vpack.c.b16 %v1460, %v1458
        %v1533 = vpack.c.b16 %v1461, %v1459
        %v1534 = vpack.c.b16 %v1464, %v1462
        %v1535 = vpack.c.b16 %v1465, %v1463
        %v1536 = vpack.c.b16 %v1468, %v1466
        %v1537 = vpack.c.b16 %v1469, %v1467
        %v1538 = vpack.c.b16 %v1472, %v1470
        %v1539 = vpack.c.b16 %v1473, %v1471
        %v1540 = vpack.c.b16 %v1476, %v1474
        %v1541 = vpack.c.b16 %v1477, %v1475
        %1606 = vmatprep.subr.bf16.mxu0 %v1493
        %1607 = vmatpush1.bf16.msra.mxu0 %v1492
        %1608 = vmatprep.subr.bf16.mxu0 %v1491
        %1609 = vmatpush1.bf16.msra.mxu0 %v1490
        %1610 = vmatprep.subr.bf16.mxu0 %v1489
        %1611 = vmatpush1.bf16.msra.mxu0 %v1488
        %1612 = vmatprep.subr.bf16.mxu0 %v1487
        %1613 = vmatpush1.bf16.msra.mxu0 %v1486
        %1614 = vmatprep.subr.bf16.mxu0 %v1485
        %1615 = vmatpush1.bf16.msra.mxu0 %v1484
        %1616 = vmatprep.subr.bf16.mxu0 %v1483
        %1617 = vmatpush1.bf16.msra.mxu0 %v1482
        %1618 = vmatprep.subr.bf16.mxu0 %v1481
        %1619 = vmatpush1.bf16.msra.mxu0 %v1480
        %1620 = vmatprep.subr.bf16.mxu0 %v1479
        %1621 = vmatpush1.bf16.msra.mxu0 %v1478
        %1622 = vmatprep.subr.bf16.mxu0 %v1509
        %1623 = vmatpush2.bf16.msra.mxu0 %v1508
        %1624 = vmatprep.subr.bf16.mxu0 %v1507
        %1625 = vmatpush2.bf16.msra.mxu0 %v1506
        %1626 = vmatprep.subr.bf16.mxu0 %v1505
        %1627 = vmatpush2.bf16.msra.mxu0 %v1504
        %1628 = vmatprep.subr.bf16.mxu0 %v1503
        %1629 = vmatpush2.bf16.msra.mxu0 %v1502
        %1630 = vmatprep.subr.bf16.mxu0 %v1501
        %1631 = vmatpush2.bf16.msra.mxu0 %v1500
        %1632 = vmatprep.subr.bf16.mxu0 %v1499
        %1633 = vmatpush2.bf16.msra.mxu0 %v1498
        %1634 = vmatprep.subr.bf16.mxu0 %v1497
        %1635 = vmatpush2.bf16.msra.mxu0 %v1496
        %1636 = vmatprep.subr.bf16.mxu0 %v1495
        %1637 = vmatpush2.bf16.msra.mxu0 %v1494
        %1638 = vmatprep.mubr.bf16.mxu0 %v1217
        %1639 = vmatmul.mubr.bf16.gmra.mxu0 %v1216
        %v1640 = vpop.f32.mrf.mxu0
        %v1641 = vadd.f32 0.0, %v1640
        %v1642 = vpop.f32.mrf.mxu0
        %v1643 = vadd.f32 0.0, %v1642
        %v1644 = vpop.f32.mrf.mxu0
        %v1645 = vpop.f32.mrf.mxu0
        %1646 = vdwg.mxu0
        %1647 = vmatprep.subr.bf16.mxu0 %v1525
        %1648 = vmatpush1.bf16.msra.mxu0 %v1524
        %1649 = vmatprep.subr.bf16.mxu0 %v1523
        %1650 = vmatpush1.bf16.msra.mxu0 %v1522
        %1651 = vmatprep.subr.bf16.mxu0 %v1521
        %1652 = vmatpush1.bf16.msra.mxu0 %v1520
        %1653 = vmatprep.subr.bf16.mxu0 %v1519
        %1654 = vmatpush1.bf16.msra.mxu0 %v1518
        %1655 = vmatprep.subr.bf16.mxu0 %v1517
        %1656 = vmatpush1.bf16.msra.mxu0 %v1516
        %1657 = vmatprep.subr.bf16.mxu0 %v1515
        %1658 = vmatpush1.bf16.msra.mxu0 %v1514
        %1659 = vmatprep.subr.bf16.mxu0 %v1513
        %1660 = vmatpush1.bf16.msra.mxu0 %v1512
        %1661 = vmatprep.subr.bf16.mxu0 %v1511
        %1662 = vmatpush1.bf16.msra.mxu0 %v1510
        %1663 = vmatprep.subr.bf16.mxu0 %v1541
        %1664 = vmatpush2.bf16.msra.mxu0 %v1540
        %1665 = vmatprep.subr.bf16.mxu0 %v1539
        %1666 = vmatpush2.bf16.msra.mxu0 %v1538
        %1667 = vmatprep.subr.bf16.mxu0 %v1537
        %1668 = vmatpush2.bf16.msra.mxu0 %v1536
        %1669 = vmatprep.subr.bf16.mxu0 %v1535
        %1670 = vmatpush2.bf16.msra.mxu0 %v1534
        %1671 = vmatprep.subr.bf16.mxu0 %v1533
        %1672 = vmatpush2.bf16.msra.mxu0 %v1532
        %1673 = vmatprep.subr.bf16.mxu0 %v1531
        %1674 = vmatpush2.bf16.msra.mxu0 %v1530
        %1675 = vmatprep.subr.bf16.mxu0 %v1529
        %1676 = vmatpush2.bf16.msra.mxu0 %v1528
        %1677 = vmatprep.subr.bf16.mxu0 %v1527
        %1678 = vmatpush2.bf16.msra.mxu0 %v1526
        %1679 = vmatprep.mubr.bf16.mxu0 %v1219
        %1680 = vmatmul.mubr.bf16.gmra.mxu0 %v1218
        %v1681 = vpop.f32.mrf.mxu0
        %v1682 = vadd.f32 %v1641, %v1681
        %v1683 = vpop.f32.mrf.mxu0
        %v1684 = vadd.f32 %v1643, %v1683
        %v1685 = vpop.f32.mrf.mxu0
        %v1686 = vpop.f32.mrf.mxu0
        %1687 = vdwg.mxu0
        %v1688 = vadd.f32 %v1220, %v1682
        %v1689 = vadd.f32 %v1221, %v1684
        %1690 = vst [vmem:[#allocation2] sm:$0xff] %v1688
        %1691 = vst [vmem:[#allocation2 + $0x8] sm:$0xff] %v1689
        // Predicated region
        $region45: #{gemma_mlp.1} parent=31 // pred_check
          %p1692 = pneg %p230
        $region46: #{gemma_mlp.1} parent=31 // pred_check_branch
          %1694 = sbr.rel (%p1692) target = $region48
        $region47: #{gemma_mlp.1} parent=31 // pred_region
          %v1695 = vld [vmem:[#allocation2] sm:$0xff]
          %v1696 = vld [vmem:[#allocation2 + $0x8] sm:$0xff]
          %1697 = vst [vmem:[%s222] sm:$0xff] %v1695
          %1698 = vst [vmem:[%s222 + $0x8] sm:$0xff] %v1696
        $region48: #{gemma_mlp.1} parent=31 // pred_fallthru
          _
        %s1699 = sand.u32 %s117, 1
        %s1700 = scalar_lea.sflag [#allocation5], %s1699
        %s1701 = sand.u32 %s117, 1
        %s1702 = smul.addr %s1701, 16
        %s1703 = scalar_lea.vmem [#allocation8], %s1702
        // Predicated region
        $region49: #{gemma_mlp.1} parent=31 // pred_check
          %p1704 = pneg %p127
        $region50: #{gemma_mlp.1} parent=31 // pred_check_branch
          %1706 = sbr.rel (%p1704) target = $region52
        $region51: #{gemma_mlp.1} parent=31 // pred_region
          %s1708 = ssub.s32 256, 256
          %1709 = vsyncadd %s1700, %s1708
          %s1710 = smul.addr %s23, 2
          %s1711 = smul.addr %s1710, 128
          %s1712 = scalar_lea.hbm %s3, %s1711
          %s1714 = sshll.u32 %s1703, 4
          %s1715 = int_to_ptr.vmem [resolvable:$true] %s1714
          %1717 = dma.vmem_to_hbm [thread:$0]  %s1715, 256, %s1712, %s1700
        $region52: #{gemma_mlp.1} parent=31 // pred_fallthru
          _
      $region32: #{gemma_mlp.1} parent=5 // pred_fallthru
        _
      %p1718 = scmp.le.s32.totalorder 2, %s14
      // Predicated region
      $region53: #{gemma_mlp.1} parent=5 // pred_check
        %p1719 = pneg %p1718
      $region54: #{gemma_mlp.1} parent=5 // pred_check_branch
        %1721 = sbr.rel (%p1719) target = $region56
      $region55: #{gemma_mlp.1} parent=5 // pred_region
        %s1722 = ssub.s32 %s14, 2
        // Predicated region
        $region57: #{gemma_mlp.1} parent=55 // pred_check
          %p1723 = pneg %p133
        $region58: #{gemma_mlp.1} parent=55 // pred_check_branch
          %1725 = sbr.rel (%p1723) target = $region60
        $region59: #{gemma_mlp.1} parent=55 // pred_region
          %s1726 = sand.u32 %s118, 1
          %s1727 = scalar_lea.sflag [#allocation5], %s1726
          %s1728 = sand.u32 %s118, 1
          %s1729 = smul.addr %s1728, 16
          %s1730 = scalar_lea.vmem [#allocation8], %s1729
          %1731 = dma.done %s1727, 256
        $region60: #{gemma_mlp.1} parent=55 // pred_fallthru
          _
      $region56: #{gemma_mlp.1} parent=5 // pred_fallthru
        _
    $region6: #{gemma_mlp.1} parent=1 // loop_footer
      %s18 = sadd.s32 1, %s14
    $region7: #{gemma_mlp.1} parent=1 // loop_footer_branch
      %13 = sbr.rel target = $region3
    $region8: #{gemma_mlp.1} parent=1 // loop_exit
      _
    %1732 = vsyncpa [#allocation4], 1
    %s1733 = scalar_lea.sflag [#allocation4], 1
    %1734 = vsyncpa %s1733, 1
    %1735 = vsyncpa [#allocation7], 1
    %1736 = vsyncpa [#allocation5], 1
    %s1737 = scalar_lea.sflag [#allocation5], 1
    %1738 = vsyncpa %s1737, 1

</llo_original>
